<compile_context>
chip_gen: v5e
topology: v5e:2x2
jax: 0.10.0
libtpu: 0.0.40
codegen_flags: <defaults>
</compile_context>

<pallas_src>
import functools

import jax
import jax.numpy as jnp
from jax.experimental import pallas as pl
from jax.experimental.pallas import tpu as pltpu


# ----------------------------------------------------------------------------
# Fused Pallas kernel (built via closure over static per-layer branch choices)
# ----------------------------------------------------------------------------

def _sage_layer_f32(a_bf16, h_bf16, w_packed, b_f32, project_first, hidden):
    """One SAGEConv layer + ReLU (f32 result), neigh+root fused into one dot.

    project_first == False  (F_in <= hidden):
        w_packed = [W_l ; W_r]  shape (2*F_in, H)
        out = relu( concat([A@h, h], lanes) @ w_packed + b )
    project_first == True   (F_in >  hidden):
        w_packed = [W_l | W_r]  shape (F_in, 2*H)
        proj = h @ w_packed ;  out = relu( A @ proj[:, :H] + proj[:, H:] + b )
    """
    if project_first:
        proj = jnp.dot(h_bf16, w_packed, preferred_element_type=jnp.float32)  # (N, 2H)
        neigh = jnp.dot(a_bf16, proj[:, :hidden].astype(jnp.bfloat16),
                        preferred_element_type=jnp.float32)
        out = neigh + proj[:, hidden:] + b_f32
    else:
        agg = jnp.dot(a_bf16, h_bf16, preferred_element_type=jnp.float32)     # (N, F_in)
        cat = jnp.concatenate([agg.astype(jnp.bfloat16), h_bf16], axis=1)     # (N, 2F_in)
        out = jnp.dot(cat, w_packed, preferred_element_type=jnp.float32) + b_f32
    return jnp.maximum(out, 0.0)  # f32 elementwise (v5e-safe)


def _make_graphsage_jk_kernel(project_first_flags, hidden):
    f1, f2, f3 = project_first_flags

    def kernel(a_ref, p_ref, x_ref,
               wc1_ref, bc1_ref, wc2_ref, bc2_ref, wc3_ref, bc3_ref,
               w1_ref, b1_ref, w2_ref, b2_ref, o_ref):
        a = a_ref[...]   # [N, N] bf16 row-normalized adjacency -- loaded once
        p = p_ref[...]   # [G, N] bf16 mean-pool matrix

        # --- SAGEConv + ReLU layers; pool each h_k as soon as it is dead -----
        h1 = _sage_layer_f32(a, x_ref[...], wc1_ref[...], bc1_ref[...], f1, hidden)
        h1b = h1.astype(jnp.bfloat16)
        h2 = _sage_layer_f32(a, h1b, wc2_ref[...], bc2_ref[...], f2, hidden)
        pooled1 = jnp.dot(p, h1b, preferred_element_type=jnp.float32)   # h1 dead
        h2b = h2.astype(jnp.bfloat16)
        h3 = _sage_layer_f32(a, h2b, wc3_ref[...], bc3_ref[...], f3, hidden)
        pooled2 = jnp.dot(p, h2b, preferred_element_type=jnp.float32)   # h2 dead
        pooled3 = jnp.dot(p, h3.astype(jnp.bfloat16),
                          preferred_element_type=jnp.float32)           # h3 dead

        # --- JumpingKnowledge('cat') + lin1 as a single K=3H matmul ----------
        pooled_cat = jnp.concatenate([pooled1, pooled2, pooled3],
                                     axis=1).astype(jnp.bfloat16)       # (G, 3H)
        hid = jnp.maximum(
            jnp.dot(pooled_cat, w1_ref[...], preferred_element_type=jnp.float32)
            + b1_ref[...], 0.0)

        # TODO(synk): F.dropout(p=0.5, training=...) is eval-mode identity here;
        # training mode would need pltpu.prng_seed + prng_random_bits masking.

        logits = (jnp.dot(hid.astype(jnp.bfloat16), w2_ref[...],
                          preferred_element_type=jnp.float32) + b2_ref[...])
        m = jnp.max(logits, axis=-1, keepdims=True)
        shifted = logits - m
        lse = jnp.log(jnp.sum(jnp.exp(shifted), axis=-1, keepdims=True))
        o_ref[...] = shifted - lse

    return kernel


# ----------------------------------------------------------------------------
# pallas_call wrapper (whole problem fits in VMEM -> single block, no grid)
# ----------------------------------------------------------------------------

def graphsage_jk_fused(a_mean_bf16, pool_bf16, x, params):
    convs = params["convs"]
    assert len(convs) == 3, "fused kernel is specialized for num_layers=3"
    hidden = convs[0]["w_l"].shape[1]
    n = x.shape[0]
    g = pool_bf16.shape[0]
    c = params["w2"].shape[1]

    bf16 = lambda t: t.astype(jnp.bfloat16)

    # Pack each layer's [W_l, W_r] into ONE bf16 array; association chosen
    # statically from shapes (project-first iff F_in > hidden).
    flags = []
    conv_args = []
    for layer in convs:
        f_in = layer["w_l"].shape[0]
        project_first = f_in > hidden
        flags.append(project_first)
        axis = 1 if project_first else 0     # [W_l | W_r] vs [W_l ; W_r]
        w_packed = jnp.concatenate([layer["w_l"], layer["w_r"]], axis=axis)
        conv_args += [bf16(w_packed), layer["b"]]

    args = ([a_mean_bf16, pool_bf16, bf16(x)]
            + conv_args
            + [bf16(params["w1"]), params["b1"], bf16(params["w2"]), params["b2"]])

    # VMEM budget: all resident buffers + live f32 activations, with headroom.
    buf_bytes = sum(int(a.size) * a.dtype.itemsize for a in args) + g * c * 4
    act_bytes = 3 * n * hidden * 4 + n * 2 * hidden * 4
    vmem_limit = min(2 * (buf_bytes + act_bytes) + (8 << 20), 96 << 20)

    kernel = _make_graphsage_jk_kernel(tuple(flags), hidden)
    vmem_spec = pl.BlockSpec(memory_space=pltpu.MemorySpace.VMEM)

    return pl.pallas_call(
        kernel,
        out_shape=jax.ShapeDtypeStruct((g, c), jnp.float32),
        in_specs=[vmem_spec for _ in args],
        out_specs=vmem_spec,
        compiler_params=pltpu.CompilerParams(vmem_limit_bytes=vmem_limit),
    )(*args)


# ----------------------------------------------------------------------------
# Glue: bf16 adjacency / pooling matrices, parameters, forward pass
# ----------------------------------------------------------------------------

def build_mean_adjacency_bf16(edge_index, num_nodes):
    """A_mean[i, j] = 1/in_deg(i) for each edge j->i (PyG source_to_target).

    Degrees are computed in f32 (O(E)); only the dense N x N slab is bf16, so
    the wrapper writes/reads half the HBM bytes of a dense f32 build + cast.
    """
    src, dst = edge_index[0], edge_index[1]
    deg = jnp.zeros((num_nodes,), jnp.float32).at[dst].add(1.0)
    inv = 1.0 / jnp.maximum(deg, 1.0)
    vals = inv[dst].astype(jnp.bfloat16)
    a = jnp.zeros((num_nodes, num_nodes), jnp.bfloat16)
    return a.at[dst, src].add(vals)   # duplicate edges add with multiplicity (PyG semantics)


def build_mean_pool_bf16(batch, num_nodes, num_graphs):
    cnt = jnp.zeros((num_graphs,), jnp.float32).at[batch].add(1.0)
    inv = 1.0 / jnp.maximum(cnt, 1.0)
    p = jnp.zeros((num_graphs, num_nodes), jnp.bfloat16)
    return p.at[batch, jnp.arange(num_nodes)].set(inv[batch].astype(jnp.bfloat16))


def init_params(key, num_features, hidden, num_layers, output_channels):
    """Deterministic synthetic params; linear weights stored as [fan_in, fan_out]."""
    params = {"convs": []}
    dims = [num_features] + [hidden] * (num_layers - 1)
    for d_in in dims:
        key, k1, k2, k3 = jax.random.split(key, 4)
        bound = 1.0 / jnp.sqrt(jnp.float32(d_in))
        params["convs"].append(
            dict(
                w_l=jax.random.uniform(k1, (d_in, hidden), jnp.float32, -bound, bound),
                w_r=jax.random.uniform(k2, (d_in, hidden), jnp.float32, -bound, bound),
                b=jax.random.uniform(k3, (1, hidden), jnp.float32, -bound, bound),
            )
        )
    key, k1, k2, k3, k4 = jax.random.split(key, 5)
    d1 = num_layers * hidden  # JumpingKnowledge mode='cat'
    b1 = 1.0 / jnp.sqrt(jnp.float32(d1))
    b2 = 1.0 / jnp.sqrt(jnp.float32(hidden))
    params["w1"] = jax.random.uniform(k1, (d1, hidden), jnp.float32, -b1, b1)
    params["b1"] = jax.random.uniform(k2, (1, hidden), jnp.float32, -b1, b1)
    params["w2"] = jax.random.uniform(k3, (hidden, output_channels), jnp.float32, -b2, b2)
    params["b2"] = jax.random.uniform(k4, (1, output_channels), jnp.float32, -b2, b2)
    return params


@functools.partial(jax.jit, static_argnames=("num_graphs",))
def graphsage_jk_forward(params, x, edge_index, batch, num_graphs):
    n = x.shape[0]
    a_mean = build_mean_adjacency_bf16(edge_index, n)
    pool = build_mean_pool_bf16(batch, n, num_graphs)
    return graphsage_jk_fused(a_mean, pool, x, params)


# ----------------------------------------------------------------------------
# main
# ----------------------------------------------------------------------------

if __name__ == "__main__":
    # hidden=128 is the module default; N/F chosen as multiples of 128 so the
    # MXU contraction/output dims are full-width on v5e and reasonable on v6e/v7x.
    NUM_NODES = 256
    NUM_FEATURES = 128
    HIDDEN = 128
    NUM_LAYERS = 3
    OUTPUT_CHANNELS = 8
    NUM_GRAPHS = 8
    NUM_EDGES = 2048

    key = jax.random.PRNGKey(0)
    k_feat, k_src, k_dst, k_param = jax.random.split(key, 4)

    x = jax.random.normal(k_feat, (NUM_NODES, NUM_FEATURES), jnp.float32)
    edge_index = jnp.stack(
        [
            jax.random.randint(k_src, (NUM_EDGES,), 0, NUM_NODES),
            jax.random.randint(k_dst, (NUM_EDGES,), 0, NUM_NODES),
        ],
        axis=0,
    ).astype(jnp.int32)
    # Nodes evenly assigned to graphs (sorted, like typical PyG batching).
    batch = jnp.repeat(jnp.arange(NUM_GRAPHS, dtype=jnp.int32),
                       NUM_NODES // NUM_GRAPHS)

    params = init_params(k_param, NUM_FEATURES, HIDDEN, NUM_LAYERS, OUTPUT_CHANNELS)

    out = graphsage_jk_forward(params, x, edge_index, batch, NUM_GRAPHS)
    out = jax.block_until_ready(out)

    assert out.shape == (NUM_GRAPHS, OUTPUT_CHANNELS)
    # log_softmax rows should exponentiate-sum to ~1 (computed in f32 in-kernel).
    assert jnp.allclose(jnp.sum(jnp.exp(out), axis=-1), 1.0, atol=1e-4)
    print("KERNEL_OK")
</pallas_src>

<mosaic_0001>
module attributes {stable_mosaic.version = 11 : i64} {
  func.func @kernel(%arg0: memref<256x256xbf16, #tpu.memory_space<vmem>>, %arg1: memref<8x256xbf16, #tpu.memory_space<vmem>>, %arg2: memref<256x128xbf16, #tpu.memory_space<vmem>>, %arg3: memref<256x128xbf16, #tpu.memory_space<vmem>>, %arg4: memref<1x128xf32, #tpu.memory_space<vmem>>, %arg5: memref<256x128xbf16, #tpu.memory_space<vmem>>, %arg6: memref<1x128xf32, #tpu.memory_space<vmem>>, %arg7: memref<256x128xbf16, #tpu.memory_space<vmem>>, %arg8: memref<1x128xf32, #tpu.memory_space<vmem>>, %arg9: memref<384x128xbf16, #tpu.memory_space<vmem>>, %arg10: memref<1x128xf32, #tpu.memory_space<vmem>>, %arg11: memref<128x8xbf16, #tpu.memory_space<vmem>>, %arg12: memref<1x8xf32, #tpu.memory_space<vmem>>, %arg13: memref<8x8xf32, #tpu.memory_space<vmem>>) attributes {dimension_semantics = [], scalar_prefetch = 0 : i64, scratch_operands = 0 : i64, tpu.core_type = #tpu.core_type<tc>} {
    %c0 = arith.constant 0 : index
    %c0_0 = arith.constant 0 : index
    %0 = vector.load %arg0[%c0, %c0_0] : memref<256x256xbf16, #tpu.memory_space<vmem>>, vector<256x256xbf16>
    %c0_1 = arith.constant 0 : index
    %c0_2 = arith.constant 0 : index
    %1 = vector.load %arg1[%c0_1, %c0_2] : memref<8x256xbf16, #tpu.memory_space<vmem>>, vector<8x256xbf16>
    %c0_3 = arith.constant 0 : index
    %c0_4 = arith.constant 0 : index
    %2 = vector.load %arg2[%c0_3, %c0_4] : memref<256x128xbf16, #tpu.memory_space<vmem>>, vector<256x128xbf16>
    %c0_5 = arith.constant 0 : index
    %c0_6 = arith.constant 0 : index
    %3 = vector.load %arg3[%c0_5, %c0_6] : memref<256x128xbf16, #tpu.memory_space<vmem>>, vector<256x128xbf16>
    %c0_7 = arith.constant 0 : index
    %c0_8 = arith.constant 0 : index
    %4 = vector.load %arg4[%c0_7, %c0_8] : memref<1x128xf32, #tpu.memory_space<vmem>>, vector<1x128xf32>
    %cst = arith.constant dense<0.000000e+00> : vector<256x128xf32>
    %5 = tpu.matmul %0, %2, %cst {dimension_numbers = #tpu.dot_dimension_numbers<[1], [0], [0], [1], [0, 0, 1, 1], [], []>} : vector<256x256xbf16>, vector<256x128xbf16>, vector<256x128xf32> -> vector<256x128xf32>
    %6 = arith.truncf %5 : vector<256x128xf32> to vector<256x128xbf16>
    %7 = tpu.concatenate %6, %2 in 1 : vector<256x128xbf16>, vector<256x128xbf16> -> vector<256x256xbf16>
    %cst_9 = arith.constant dense<0.000000e+00> : vector<256x128xf32>
    %8 = tpu.matmul %7, %3, %cst_9 {dimension_numbers = #tpu.dot_dimension_numbers<[1], [0], [0], [1], [0, 0, 1, 1], [], []>} : vector<256x256xbf16>, vector<256x128xbf16>, vector<256x128xf32> -> vector<256x128xf32>
    %9 = vector.broadcast %4 : vector<1x128xf32> to vector<256x128xf32>
    %10 = arith.addf %8, %9 : vector<256x128xf32>
    %cst_10 = arith.constant 0.000000e+00 : f32
    %11 = vector.broadcast %cst_10 : f32 to vector<256x128xf32>
    %12 = arith.maximumf %10, %11 : vector<256x128xf32>
    %13 = arith.truncf %12 : vector<256x128xf32> to vector<256x128xbf16>
    %c0_11 = arith.constant 0 : index
    %c0_12 = arith.constant 0 : index
    %14 = vector.load %arg5[%c0_11, %c0_12] : memref<256x128xbf16, #tpu.memory_space<vmem>>, vector<256x128xbf16>
    %c0_13 = arith.constant 0 : index
    %c0_14 = arith.constant 0 : index
    %15 = vector.load %arg6[%c0_13, %c0_14] : memref<1x128xf32, #tpu.memory_space<vmem>>, vector<1x128xf32>
    %cst_15 = arith.constant dense<0.000000e+00> : vector<256x128xf32>
    %16 = tpu.matmul %0, %13, %cst_15 {dimension_numbers = #tpu.dot_dimension_numbers<[1], [0], [0], [1], [0, 0, 1, 1], [], []>} : vector<256x256xbf16>, vector<256x128xbf16>, vector<256x128xf32> -> vector<256x128xf32>
    %17 = arith.truncf %16 : vector<256x128xf32> to vector<256x128xbf16>
    %18 = tpu.concatenate %17, %13 in 1 : vector<256x128xbf16>, vector<256x128xbf16> -> vector<256x256xbf16>
    %cst_16 = arith.constant dense<0.000000e+00> : vector<256x128xf32>
    %19 = tpu.matmul %18, %14, %cst_16 {dimension_numbers = #tpu.dot_dimension_numbers<[1], [0], [0], [1], [0, 0, 1, 1], [], []>} : vector<256x256xbf16>, vector<256x128xbf16>, vector<256x128xf32> -> vector<256x128xf32>
    %20 = vector.broadcast %15 : vector<1x128xf32> to vector<256x128xf32>
    %21 = arith.addf %19, %20 : vector<256x128xf32>
    %cst_17 = arith.constant 0.000000e+00 : f32
    %22 = vector.broadcast %cst_17 : f32 to vector<256x128xf32>
    %23 = arith.maximumf %21, %22 : vector<256x128xf32>
    %cst_18 = arith.constant dense<0.000000e+00> : vector<8x128xf32>
    %24 = tpu.matmul %1, %13, %cst_18 {dimension_numbers = #tpu.dot_dimension_numbers<[1], [0], [0], [1], [0, 0, 1, 1], [], []>} : vector<8x256xbf16>, vector<256x128xbf16>, vector<8x128xf32> -> vector<8x128xf32>
    %25 = arith.truncf %23 : vector<256x128xf32> to vector<256x128xbf16>
    %c0_19 = arith.constant 0 : index
    %c0_20 = arith.constant 0 : index
    %26 = vector.load %arg7[%c0_19, %c0_20] : memref<256x128xbf16, #tpu.memory_space<vmem>>, vector<256x128xbf16>
    %c0_21 = arith.constant 0 : index
    %c0_22 = arith.constant 0 : index
    %27 = vector.load %arg8[%c0_21, %c0_22] : memref<1x128xf32, #tpu.memory_space<vmem>>, vector<1x128xf32>
    %cst_23 = arith.constant dense<0.000000e+00> : vector<256x128xf32>
    %28 = tpu.matmul %0, %25, %cst_23 {dimension_numbers = #tpu.dot_dimension_numbers<[1], [0], [0], [1], [0, 0, 1, 1], [], []>} : vector<256x256xbf16>, vector<256x128xbf16>, vector<256x128xf32> -> vector<256x128xf32>
    %29 = arith.truncf %28 : vector<256x128xf32> to vector<256x128xbf16>
    %30 = tpu.concatenate %29, %25 in 1 : vector<256x128xbf16>, vector<256x128xbf16> -> vector<256x256xbf16>
    %cst_24 = arith.constant dense<0.000000e+00> : vector<256x128xf32>
    %31 = tpu.matmul %30, %26, %cst_24 {dimension_numbers = #tpu.dot_dimension_numbers<[1], [0], [0], [1], [0, 0, 1, 1], [], []>} : vector<256x256xbf16>, vector<256x128xbf16>, vector<256x128xf32> -> vector<256x128xf32>
    %32 = vector.broadcast %27 : vector<1x128xf32> to vector<256x128xf32>
    %33 = arith.addf %31, %32 : vector<256x128xf32>
    %cst_25 = arith.constant 0.000000e+00 : f32
    %34 = vector.broadcast %cst_25 : f32 to vector<256x128xf32>
    %35 = arith.maximumf %33, %34 : vector<256x128xf32>
    %cst_26 = arith.constant dense<0.000000e+00> : vector<8x128xf32>
    %36 = tpu.matmul %1, %25, %cst_26 {dimension_numbers = #tpu.dot_dimension_numbers<[1], [0], [0], [1], [0, 0, 1, 1], [], []>} : vector<8x256xbf16>, vector<256x128xbf16>, vector<8x128xf32> -> vector<8x128xf32>
    %37 = arith.truncf %35 : vector<256x128xf32> to vector<256x128xbf16>
    %cst_27 = arith.constant dense<0.000000e+00> : vector<8x128xf32>
    %38 = tpu.matmul %1, %37, %cst_27 {dimension_numbers = #tpu.dot_dimension_numbers<[1], [0], [0], [1], [0, 0, 1, 1], [], []>} : vector<8x256xbf16>, vector<256x128xbf16>, vector<8x128xf32> -> vector<8x128xf32>
    %39 = tpu.concatenate %24, %36, %38 in 1 : vector<8x128xf32>, vector<8x128xf32>, vector<8x128xf32> -> vector<8x384xf32>
    %40 = arith.truncf %39 : vector<8x384xf32> to vector<8x384xbf16>
    %c0_28 = arith.constant 0 : index
    %c0_29 = arith.constant 0 : index
    %41 = vector.load %arg9[%c0_28, %c0_29] : memref<384x128xbf16, #tpu.memory_space<vmem>>, vector<384x128xbf16>
    %cst_30 = arith.constant dense<0.000000e+00> : vector<8x128xf32>
    %42 = tpu.matmul %40, %41, %cst_30 {dimension_numbers = #tpu.dot_dimension_numbers<[1], [0], [0], [1], [0, 0, 1, 1], [], []>} : vector<8x384xbf16>, vector<384x128xbf16>, vector<8x128xf32> -> vector<8x128xf32>
    %c0_31 = arith.constant 0 : index
    %c0_32 = arith.constant 0 : index
    %43 = vector.load %arg10[%c0_31, %c0_32] : memref<1x128xf32, #tpu.memory_space<vmem>>, vector<1x128xf32>
    %44 = vector.broadcast %43 : vector<1x128xf32> to vector<8x128xf32>
    %45 = arith.addf %42, %44 : vector<8x128xf32>
    %cst_33 = arith.constant 0.000000e+00 : f32
    %46 = vector.broadcast %cst_33 : f32 to vector<8x128xf32>
    %47 = arith.maximumf %45, %46 : vector<8x128xf32>
    %48 = arith.truncf %47 : vector<8x128xf32> to vector<8x128xbf16>
    %c0_34 = arith.constant 0 : index
    %c0_35 = arith.constant 0 : index
    %49 = vector.load %arg11[%c0_34, %c0_35] : memref<128x8xbf16, #tpu.memory_space<vmem>>, vector<128x8xbf16>
    %cst_36 = arith.constant dense<0.000000e+00> : vector<8x8xf32>
    %50 = tpu.matmul %48, %49, %cst_36 {dimension_numbers = #tpu.dot_dimension_numbers<[1], [0], [0], [1], [0, 0, 1, 1], [], []>} : vector<8x128xbf16>, vector<128x8xbf16>, vector<8x8xf32> -> vector<8x8xf32>
    %c0_37 = arith.constant 0 : index
    %c0_38 = arith.constant 0 : index
    %51 = vector.load %arg12[%c0_37, %c0_38] : memref<1x8xf32, #tpu.memory_space<vmem>>, vector<1x8xf32>
    %52 = vector.broadcast %51 : vector<1x8xf32> to vector<8x8xf32>
    %53 = arith.addf %50, %52 : vector<8x8xf32>
    %cst_39 = arith.constant dense<0xFF800000> : vector<8xf32>
    %54 = vector.multi_reduction <maximumf>, %53, %cst_39 [1] : vector<8x8xf32> to vector<8xf32>
    %55 = vector.shape_cast %54 : vector<8xf32> to vector<8x1xf32>
    %56 = vector.broadcast %55 : vector<8x1xf32> to vector<8x8xf32>
    %57 = arith.subf %53, %56 : vector<8x8xf32>
    %58 = math.exp %57 : vector<8x8xf32>
    %cst_40 = arith.constant dense<0.000000e+00> : vector<8xf32>
    %59 = vector.multi_reduction <add>, %58, %cst_40 [1] : vector<8x8xf32> to vector<8xf32>
    %60 = vector.shape_cast %59 : vector<8xf32> to vector<8x1xf32>
    %61 = math.log %60 : vector<8x1xf32>
    %62 = vector.broadcast %61 : vector<8x1xf32> to vector<8x8xf32>
    %63 = arith.subf %57, %62 : vector<8x8xf32>
    %c0_41 = arith.constant 0 : index
    %c0_42 = arith.constant 0 : index
    %64 = vector.load %arg13[%c0_41, %c0_42] : memref<8x8xf32, #tpu.memory_space<vmem>>, vector<8x8xf32>
    tpu.vector_store %arg13[%c0_41, %c0_42], %63 {strides = array<i32>} : memref<8x8xf32, #tpu.memory_space<vmem>>, vector<8x8xf32>,
    return
  }
}

</mosaic_0001>

<llo_original>
// kernel: graphsage_jk_forward.1
$region0: #{graphsage_jk_forward.1}
  #allocation0 [shape = 'u32[]', space=smem, size = 0x4, offset = 0x4, fixed_abs, tag = 'smem constant byte address 0x4 - core index']
  #allocation1 [shape = 'u32[72,128]{1,0:T(1,128)}', space=vmem, size = 0x9000, scoped, tag = 'internal scratch']
  %s0 = inlined_call_operand.vmem [shape: bf16[256,256], index: 0, kind: input, shape index: {}]
  %s1 = inlined_call_operand.vmem [shape: bf16[8,256], index: 1, kind: input, shape index: {}]
  %s2 = inlined_call_operand.vmem [shape: bf16[256,128], index: 2, kind: input, shape index: {}]
  %s3 = inlined_call_operand.vmem [shape: bf16[256,128], index: 3, kind: input, shape index: {}]
  %s4 = inlined_call_operand.vmem [shape: f32[1,128], index: 4, kind: input, shape index: {}]
  %s5 = inlined_call_operand.vmem [shape: bf16[256,128], index: 5, kind: input, shape index: {}]
  %s6 = inlined_call_operand.vmem [shape: f32[1,128], index: 6, kind: input, shape index: {}]
  %s7 = inlined_call_operand.vmem [shape: bf16[256,128], index: 7, kind: input, shape index: {}]
  %s8 = inlined_call_operand.vmem [shape: f32[1,128], index: 8, kind: input, shape index: {}]
  %s9 = inlined_call_operand.vmem [shape: bf16[384,128], index: 9, kind: input, shape index: {}]
  %s10 = inlined_call_operand.vmem [shape: f32[1,128], index: 10, kind: input, shape index: {}]
  %s11 = inlined_call_operand.vmem [shape: bf16[128,8], index: 11, kind: input, shape index: {}]
  %s12 = inlined_call_operand.vmem [shape: f32[1,8], index: 12, kind: input, shape index: {}]
  %s13 = inlined_call_operand.hbm [shape: f32[8,8], index: 13, kind: output, shape index: {}]
  %s14 = sld [smem:[#allocation0]]
  $region62: #{graphsage_jk_forward.1} parent=0
    _
  %s16 = ssub.s32 1, %s14
  %s17 = scalar_select 0, %s16, %s14
  $region1: #{graphsage_jk_forward.1} parent=0
    #allocation2 [shape = 'u8[4096]{0}', space=vmem, size = 0x1000, scoped, tag = 'output window, operand 0, single buffered']
    #allocation3 [shape = 's32[1]{0}', space=sflag, size = 0x4, scoped, tag = 'scoped memory for graphsage_jk_forward.1']
    %18 = vsyncpa [#allocation3], 0
    // Predicated region
    $region2: #{graphsage_jk_forward.1} parent=1 // pred_check
      _
    $region3: #{graphsage_jk_forward.1} parent=1 // pred_check_branch
      %20 = sbr.rel (0) target = $region5
    $region4: #{graphsage_jk_forward.1} parent=1 // pred_region
      _
    $region5: #{graphsage_jk_forward.1} parent=1 // pred_fallthru
      _
    // Predicated region
    $region6: #{graphsage_jk_forward.1} parent=1 // pred_check
      _
    $region7: #{graphsage_jk_forward.1} parent=1 // pred_check_branch
      %22 = sbr.rel (0) target = $region9
    $region8: #{graphsage_jk_forward.1} parent=1 // pred_region
      _
    $region9: #{graphsage_jk_forward.1} parent=1 // pred_fallthru
      _
    // Predicated region
    $region10: #{graphsage_jk_forward.1} parent=1 // pred_check
      _
    $region11: #{graphsage_jk_forward.1} parent=1 // pred_check_branch
      %24 = sbr.rel (0) target = $region13
    $region12: #{graphsage_jk_forward.1} parent=1 // pred_region
      _
    $region13: #{graphsage_jk_forward.1} parent=1 // pred_fallthru
      _
    // Predicated region
    $region14: #{graphsage_jk_forward.1} parent=1 // pred_check
      _
    $region15: #{graphsage_jk_forward.1} parent=1 // pred_check_branch
      %26 = sbr.rel (0) target = $region17
    $region16: #{graphsage_jk_forward.1} parent=1 // pred_region
      _
    $region17: #{graphsage_jk_forward.1} parent=1 // pred_fallthru
      _
    // Predicated region
    $region18: #{graphsage_jk_forward.1} parent=1 // pred_check
      _
    $region19: #{graphsage_jk_forward.1} parent=1 // pred_check_branch
      %28 = sbr.rel (0) target = $region21
    $region20: #{graphsage_jk_forward.1} parent=1 // pred_region
      _
    $region21: #{graphsage_jk_forward.1} parent=1 // pred_fallthru
      _
    // Predicated region
    $region22: #{graphsage_jk_forward.1} parent=1 // pred_check
      _
    $region23: #{graphsage_jk_forward.1} parent=1 // pred_check_branch
      %30 = sbr.rel (0) target = $region25
    $region24: #{graphsage_jk_forward.1} parent=1 // pred_region
      _
    $region25: #{graphsage_jk_forward.1} parent=1 // pred_fallthru
      _
    // Predicated region
    $region26: #{graphsage_jk_forward.1} parent=1 // pred_check
      _
    $region27: #{graphsage_jk_forward.1} parent=1 // pred_check_branch
      %32 = sbr.rel (0) target = $region29
    $region28: #{graphsage_jk_forward.1} parent=1 // pred_region
      _
    $region29: #{graphsage_jk_forward.1} parent=1 // pred_fallthru
      _
    // Predicated region
    $region30: #{graphsage_jk_forward.1} parent=1 // pred_check
      _
    $region31: #{graphsage_jk_forward.1} parent=1 // pred_check_branch
      %34 = sbr.rel (0) target = $region33
    $region32: #{graphsage_jk_forward.1} parent=1 // pred_region
      _
    $region33: #{graphsage_jk_forward.1} parent=1 // pred_fallthru
      _
    // Predicated region
    $region34: #{graphsage_jk_forward.1} parent=1 // pred_check
      _
    $region35: #{graphsage_jk_forward.1} parent=1 // pred_check_branch
      %36 = sbr.rel (0) target = $region37
    $region36: #{graphsage_jk_forward.1} parent=1 // pred_region
      _
    $region37: #{graphsage_jk_forward.1} parent=1 // pred_fallthru
      _
    // Predicated region
    $region38: #{graphsage_jk_forward.1} parent=1 // pred_check
      _
    $region39: #{graphsage_jk_forward.1} parent=1 // pred_check_branch
      %38 = sbr.rel (0) target = $region41
    $region40: #{graphsage_jk_forward.1} parent=1 // pred_region
      _
    $region41: #{graphsage_jk_forward.1} parent=1 // pred_fallthru
      _
    // Predicated region
    $region42: #{graphsage_jk_forward.1} parent=1 // pred_check
      _
    $region43: #{graphsage_jk_forward.1} parent=1 // pred_check_branch
      %40 = sbr.rel (0) target = $region45
    $region44: #{graphsage_jk_forward.1} parent=1 // pred_region
      _
    $region45: #{graphsage_jk_forward.1} parent=1 // pred_fallthru
      _
    // Predicated region
    $region46: #{graphsage_jk_forward.1} parent=1 // pred_check
      _
    $region47: #{graphsage_jk_forward.1} parent=1 // pred_check_branch
      %42 = sbr.rel (0) target = $region49
    $region48: #{graphsage_jk_forward.1} parent=1 // pred_region
      _
    $region49: #{graphsage_jk_forward.1} parent=1 // pred_fallthru
      _
    // Predicated region
    $region50: #{graphsage_jk_forward.1} parent=1 // pred_check
      _
    $region51: #{graphsage_jk_forward.1} parent=1 // pred_check_branch
      %44 = sbr.rel (0) target = $region53
    $region52: #{graphsage_jk_forward.1} parent=1 // pred_region
      _
    $region53: #{graphsage_jk_forward.1} parent=1 // pred_fallthru
      _
    %v45 = vld [vmem:[%s0] sm:$0xff]
    %v46 = vld [vmem:[%s0 + $0x8] sm:$0xff]
    %v47 = vld [vmem:[%s0 + $0x10] sm:$0xff]
    %v48 = vld [vmem:[%s0 + $0x18] sm:$0xff]
    %v49 = vld [vmem:[%s0 + $0x20] sm:$0xff]
    %v50 = vld [vmem:[%s0 + $0x28] sm:$0xff]
    %v51 = vld [vmem:[%s0 + $0x30] sm:$0xff]
    %v52 = vld [vmem:[%s0 + $0x38] sm:$0xff]
    %v53 = vld [vmem:[%s0 + $0x40] sm:$0xff]
    %v54 = vld [vmem:[%s0 + $0x48] sm:$0xff]
    %v55 = vld [vmem:[%s0 + $0x50] sm:$0xff]
    %v56 = vld [vmem:[%s0 + $0x58] sm:$0xff]
    %v57 = vld [vmem:[%s0 + $0x60] sm:$0xff]
    %v58 = vld [vmem:[%s0 + $0x68] sm:$0xff]
    %v59 = vld [vmem:[%s0 + $0x70] sm:$0xff]
    %v60 = vld [vmem:[%s0 + $0x78] sm:$0xff]
    %v61 = vld [vmem:[%s0 + $0x80] sm:$0xff]
    %v62 = vld [vmem:[%s0 + $0x88] sm:$0xff]
    %v63 = vld [vmem:[%s0 + $0x90] sm:$0xff]
    %v64 = vld [vmem:[%s0 + $0x98] sm:$0xff]
    %v65 = vld [vmem:[%s0 + $0xa0] sm:$0xff]
    %v66 = vld [vmem:[%s0 + $0xa8] sm:$0xff]
    %v67 = vld [vmem:[%s0 + $0xb0] sm:$0xff]
    %v68 = vld [vmem:[%s0 + $0xb8] sm:$0xff]
    %v69 = vld [vmem:[%s0 + $0xc0] sm:$0xff]
    %v70 = vld [vmem:[%s0 + $0xc8] sm:$0xff]
    %v71 = vld [vmem:[%s0 + $0xd0] sm:$0xff]
    %v72 = vld [vmem:[%s0 + $0xd8] sm:$0xff]
    %v73 = vld [vmem:[%s0 + $0xe0] sm:$0xff]
    %v74 = vld [vmem:[%s0 + $0xe8] sm:$0xff]
    %v75 = vld [vmem:[%s0 + $0xf0] sm:$0xff]
    %v76 = vld [vmem:[%s0 + $0xf8] sm:$0xff]
    %v77 = vld [vmem:[%s1] sm:$0xff]
    %v78 = vld [vmem:[%s2] sm:$0xf]
    %v79 = vld [vmem:[%s2 + $0x4] sm:$0xf]
    %v80 = vld [vmem:[%s2 + $0x8] sm:$0xf]
    %v81 = vld [vmem:[%s2 + $0xc] sm:$0xf]
    %v82 = vld [vmem:[%s2 + $0x10] sm:$0xf]
    %v83 = vld [vmem:[%s2 + $0x14] sm:$0xf]
    %v84 = vld [vmem:[%s2 + $0x18] sm:$0xf]
    %v85 = vld [vmem:[%s2 + $0x1c] sm:$0xf]
    %v86 = vld [vmem:[%s2 + $0x20] sm:$0xf]
    %v87 = vld [vmem:[%s2 + $0x24] sm:$0xf]
    %v88 = vld [vmem:[%s2 + $0x28] sm:$0xf]
    %v89 = vld [vmem:[%s2 + $0x2c] sm:$0xf]
    %v90 = vld [vmem:[%s2 + $0x30] sm:$0xf]
    %v91 = vld [vmem:[%s2 + $0x34] sm:$0xf]
    %v92 = vld [vmem:[%s2 + $0x38] sm:$0xf]
    %v93 = vld [vmem:[%s2 + $0x3c] sm:$0xf]
    %v94 = vld [vmem:[%s2 + $0x40] sm:$0xf]
    %v95 = vld [vmem:[%s2 + $0x44] sm:$0xf]
    %v96 = vld [vmem:[%s2 + $0x48] sm:$0xf]
    %v97 = vld [vmem:[%s2 + $0x4c] sm:$0xf]
    %v98 = vld [vmem:[%s2 + $0x50] sm:$0xf]
    %v99 = vld [vmem:[%s2 + $0x54] sm:$0xf]
    %v100 = vld [vmem:[%s2 + $0x58] sm:$0xf]
    %v101 = vld [vmem:[%s2 + $0x5c] sm:$0xf]
    %v102 = vld [vmem:[%s2 + $0x60] sm:$0xf]
    %v103 = vld [vmem:[%s2 + $0x64] sm:$0xf]
    %v104 = vld [vmem:[%s2 + $0x68] sm:$0xf]
    %v105 = vld [vmem:[%s2 + $0x6c] sm:$0xf]
    %v106 = vld [vmem:[%s2 + $0x70] sm:$0xf]
    %v107 = vld [vmem:[%s2 + $0x74] sm:$0xf]
    %v108 = vld [vmem:[%s2 + $0x78] sm:$0xf]
    %v109 = vld [vmem:[%s2 + $0x7c] sm:$0xf]
    %v110 = vld [vmem:[%s3] sm:$0xf]
    %v111 = vld [vmem:[%s3 + $0x4] sm:$0xf]
    %v112 = vld [vmem:[%s3 + $0x8] sm:$0xf]
    %v113 = vld [vmem:[%s3 + $0xc] sm:$0xf]
    %v114 = vld [vmem:[%s3 + $0x10] sm:$0xf]
    %v115 = vld [vmem:[%s3 + $0x14] sm:$0xf]
    %v116 = vld [vmem:[%s3 + $0x18] sm:$0xf]
    %v117 = vld [vmem:[%s3 + $0x1c] sm:$0xf]
    %v118 = vld [vmem:[%s3 + $0x20] sm:$0xf]
    %v119 = vld [vmem:[%s3 + $0x24] sm:$0xf]
    %v120 = vld [vmem:[%s3 + $0x28] sm:$0xf]
    %v121 = vld [vmem:[%s3 + $0x2c] sm:$0xf]
    %v122 = vld [vmem:[%s3 + $0x30] sm:$0xf]
    %v123 = vld [vmem:[%s3 + $0x34] sm:$0xf]
    %v124 = vld [vmem:[%s3 + $0x38] sm:$0xf]
    %v125 = vld [vmem:[%s3 + $0x3c] sm:$0xf]
    %v126 = vld [vmem:[%s3 + $0x40] sm:$0xf]
    %v127 = vld [vmem:[%s3 + $0x44] sm:$0xf]
    %v128 = vld [vmem:[%s3 + $0x48] sm:$0xf]
    %v129 = vld [vmem:[%s3 + $0x4c] sm:$0xf]
    %v130 = vld [vmem:[%s3 + $0x50] sm:$0xf]
    %v131 = vld [vmem:[%s3 + $0x54] sm:$0xf]
    %v132 = vld [vmem:[%s3 + $0x58] sm:$0xf]
    %v133 = vld [vmem:[%s3 + $0x5c] sm:$0xf]
    %v134 = vld [vmem:[%s3 + $0x60] sm:$0xf]
    %v135 = vld [vmem:[%s3 + $0x64] sm:$0xf]
    %v136 = vld [vmem:[%s3 + $0x68] sm:$0xf]
    %v137 = vld [vmem:[%s3 + $0x6c] sm:$0xf]
    %v138 = vld [vmem:[%s3 + $0x70] sm:$0xf]
    %v139 = vld [vmem:[%s3 + $0x74] sm:$0xf]
    %v140 = vld [vmem:[%s3 + $0x78] sm:$0xf]
    %v141 = vld [vmem:[%s3 + $0x7c] sm:$0xf]
    %v142 = vld [vmem:[%s4] sm:$0x1]
    %v175 = vunpack.c.l.b16 %v45
    %v176 = vunpack.c.h.b16 %v45
    %v177 = vunpack.c.l.b16 %v46
    %v178 = vunpack.c.h.b16 %v46
    %v179 = vunpack.c.l.b16 %v47
    %v180 = vunpack.c.h.b16 %v47
    %v181 = vunpack.c.l.b16 %v48
    %v182 = vunpack.c.h.b16 %v48
    %v183 = vunpack.c.l.b16 %v49
    %v184 = vunpack.c.h.b16 %v49
    %v185 = vunpack.c.l.b16 %v50
    %v186 = vunpack.c.h.b16 %v50
    %v187 = vunpack.c.l.b16 %v51
    %v188 = vunpack.c.h.b16 %v51
    %v189 = vunpack.c.l.b16 %v52
    %v190 = vunpack.c.h.b16 %v52
    %v191 = vunpack.c.l.b16 %v53
    %v192 = vunpack.c.h.b16 %v53
    %v193 = vunpack.c.l.b16 %v54
    %v194 = vunpack.c.h.b16 %v54
    %v195 = vunpack.c.l.b16 %v55
    %v196 = vunpack.c.h.b16 %v55
    %v197 = vunpack.c.l.b16 %v56
    %v198 = vunpack.c.h.b16 %v56
    %v199 = vunpack.c.l.b16 %v57
    %v200 = vunpack.c.h.b16 %v57
    %v201 = vunpack.c.l.b16 %v58
    %v202 = vunpack.c.h.b16 %v58
    %v203 = vunpack.c.l.b16 %v59
    %v204 = vunpack.c.h.b16 %v59
    %v205 = vunpack.c.l.b16 %v60
    %v206 = vunpack.c.h.b16 %v60
    %v207 = vunpack.c.l.b16 %v61
    %v208 = vunpack.c.h.b16 %v61
    %v209 = vunpack.c.l.b16 %v62
    %v210 = vunpack.c.h.b16 %v62
    %v211 = vunpack.c.l.b16 %v63
    %v212 = vunpack.c.h.b16 %v63
    %v213 = vunpack.c.l.b16 %v64
    %v214 = vunpack.c.h.b16 %v64
    %v215 = vunpack.c.l.b16 %v65
    %v216 = vunpack.c.h.b16 %v65
    %v217 = vunpack.c.l.b16 %v66
    %v218 = vunpack.c.h.b16 %v66
    %v219 = vunpack.c.l.b16 %v67
    %v220 = vunpack.c.h.b16 %v67
    %v221 = vunpack.c.l.b16 %v68
    %v222 = vunpack.c.h.b16 %v68
    %v223 = vunpack.c.l.b16 %v69
    %v224 = vunpack.c.h.b16 %v69
    %v225 = vunpack.c.l.b16 %v70
    %v226 = vunpack.c.h.b16 %v70
    %v227 = vunpack.c.l.b16 %v71
    %v228 = vunpack.c.h.b16 %v71
    %v229 = vunpack.c.l.b16 %v72
    %v230 = vunpack.c.h.b16 %v72
    %v231 = vunpack.c.l.b16 %v73
    %v232 = vunpack.c.h.b16 %v73
    %v233 = vunpack.c.l.b16 %v74
    %v234 = vunpack.c.h.b16 %v74
    %v235 = vunpack.c.l.b16 %v75
    %v236 = vunpack.c.h.b16 %v75
    %v237 = vunpack.c.l.b16 %v76
    %v238 = vunpack.c.h.b16 %v76
    %v239 = vpack.c.b16 %v177, %v175
    %v240 = vpack.c.b16 %v178, %v176
    %v241 = vpack.c.b16 %v181, %v179
    %v242 = vpack.c.b16 %v182, %v180
    %v243 = vpack.c.b16 %v185, %v183
    %v244 = vpack.c.b16 %v186, %v184
    %v245 = vpack.c.b16 %v189, %v187
    %v246 = vpack.c.b16 %v190, %v188
    %v247 = vpack.c.b16 %v193, %v191
    %v248 = vpack.c.b16 %v194, %v192
    %v249 = vpack.c.b16 %v197, %v195
    %v250 = vpack.c.b16 %v198, %v196
    %v251 = vpack.c.b16 %v201, %v199
    %v252 = vpack.c.b16 %v202, %v200
    %v253 = vpack.c.b16 %v205, %v203
    %v254 = vpack.c.b16 %v206, %v204
    %v255 = vpack.c.b16 %v209, %v207
    %v256 = vpack.c.b16 %v210, %v208
    %v257 = vpack.c.b16 %v213, %v211
    %v258 = vpack.c.b16 %v214, %v212
    %v259 = vpack.c.b16 %v217, %v215
    %v260 = vpack.c.b16 %v218, %v216
    %v261 = vpack.c.b16 %v221, %v219
    %v262 = vpack.c.b16 %v222, %v220
    %v263 = vpack.c.b16 %v225, %v223
    %v264 = vpack.c.b16 %v226, %v224
    %v265 = vpack.c.b16 %v229, %v227
    %v266 = vpack.c.b16 %v230, %v228
    %v267 = vpack.c.b16 %v233, %v231
    %v268 = vpack.c.b16 %v234, %v232
    %v269 = vpack.c.b16 %v237, %v235
    %v270 = vpack.c.b16 %v238, %v236
    %v335 = vunpack.c.l.b16 %v78
    %v336 = vunpack.c.l.b16 %v79
    %v337 = vunpack.c.l.b16 %v80
    %v338 = vunpack.c.l.b16 %v81
    %v339 = vunpack.c.l.b16 %v82
    %v340 = vunpack.c.l.b16 %v83
    %v341 = vunpack.c.l.b16 %v84
    %v342 = vunpack.c.l.b16 %v85
    %v343 = vunpack.c.l.b16 %v86
    %v344 = vunpack.c.l.b16 %v87
    %v345 = vunpack.c.l.b16 %v88
    %v346 = vunpack.c.l.b16 %v89
    %v347 = vunpack.c.l.b16 %v90
    %v348 = vunpack.c.l.b16 %v91
    %v349 = vunpack.c.l.b16 %v92
    %v350 = vunpack.c.l.b16 %v93
    %v351 = vunpack.c.l.b16 %v94
    %v352 = vunpack.c.l.b16 %v95
    %v353 = vunpack.c.l.b16 %v96
    %v354 = vunpack.c.l.b16 %v97
    %v355 = vunpack.c.l.b16 %v98
    %v356 = vunpack.c.l.b16 %v99
    %v357 = vunpack.c.l.b16 %v100
    %v358 = vunpack.c.l.b16 %v101
    %v359 = vunpack.c.l.b16 %v102
    %v360 = vunpack.c.l.b16 %v103
    %v361 = vunpack.c.l.b16 %v104
    %v362 = vunpack.c.l.b16 %v105
    %v363 = vunpack.c.l.b16 %v106
    %v364 = vunpack.c.l.b16 %v107
    %v365 = vunpack.c.l.b16 %v108
    %v366 = vunpack.c.l.b16 %v109
    %v367 = vpack.c.b16 %v336, %v335
    %v368 = vpack.c.b16 %v338, %v337
    %v369 = vpack.c.b16 %v340, %v339
    %v370 = vpack.c.b16 %v342, %v341
    %v371 = vpack.c.b16 %v344, %v343
    %v372 = vpack.c.b16 %v346, %v345
    %v373 = vpack.c.b16 %v348, %v347
    %v374 = vpack.c.b16 %v350, %v349
    %v375 = vpack.c.b16 %v352, %v351
    %v376 = vpack.c.b16 %v354, %v353
    %v377 = vpack.c.b16 %v356, %v355
    %v378 = vpack.c.b16 %v358, %v357
    %v379 = vpack.c.b16 %v360, %v359
    %v380 = vpack.c.b16 %v362, %v361
    %v381 = vpack.c.b16 %v364, %v363
    %v382 = vpack.c.b16 %v366, %v365
    %399 = vmatpush.bf16.msra.mxu0 %v374
    %400 = vmatpush.bf16.msra.mxu0 %v373
    %401 = vmatpush.bf16.msra.mxu0 %v372
    %402 = vmatpush.bf16.msra.mxu0 %v371
    %403 = vmatpush.bf16.msra.mxu0 %v370
    %404 = vmatpush.bf16.msra.mxu0 %v369
    %405 = vmatpush.bf16.msra.mxu0 %v368
    %406 = vmatpush.bf16.msra.mxu0 %v367
    %407 = vmatmul.bf16.gmra.mxu0 %v239
    %v408 = vpop.f32.mrf.mxu0
    %v409 = vadd.f32 0.0, %v408
    %v410 = vpop.f32.mrf.mxu0
    %v411 = vadd.f32 0.0, %v410
    %412 = vmatmul.bf16.gmra.mxu0 %v241
    %v413 = vpop.f32.mrf.mxu0
    %v414 = vadd.f32 0.0, %v413
    %v415 = vpop.f32.mrf.mxu0
    %v416 = vadd.f32 0.0, %v415
    %417 = vmatmul.bf16.gmra.mxu0 %v243
    %v418 = vpop.f32.mrf.mxu0
    %v419 = vadd.f32 0.0, %v418
    %v420 = vpop.f32.mrf.mxu0
    %v421 = vadd.f32 0.0, %v420
    %422 = vmatmul.bf16.gmra.mxu0 %v245
    %v423 = vpop.f32.mrf.mxu0
    %v424 = vadd.f32 0.0, %v423
    %v425 = vpop.f32.mrf.mxu0
    %v426 = vadd.f32 0.0, %v425
    %427 = vmatmul.bf16.gmra.mxu0 %v247
    %v428 = vpop.f32.mrf.mxu0
    %v429 = vadd.f32 0.0, %v428
    %v430 = vpop.f32.mrf.mxu0
    %v431 = vadd.f32 0.0, %v430
    %432 = vmatmul.bf16.gmra.mxu0 %v249
    %v433 = vpop.f32.mrf.mxu0
    %v434 = vadd.f32 0.0, %v433
    %v435 = vpop.f32.mrf.mxu0
    %v436 = vadd.f32 0.0, %v435
    %437 = vmatmul.bf16.gmra.mxu0 %v251
    %v438 = vpop.f32.mrf.mxu0
    %v439 = vadd.f32 0.0, %v438
    %v440 = vpop.f32.mrf.mxu0
    %v441 = vadd.f32 0.0, %v440
    %442 = vmatmul.bf16.gmra.mxu0 %v253
    %v443 = vpop.f32.mrf.mxu0
    %v444 = vadd.f32 0.0, %v443
    %v445 = vpop.f32.mrf.mxu0
    %v446 = vadd.f32 0.0, %v445
    %447 = vmatmul.bf16.gmra.mxu0 %v255
    %v448 = vpop.f32.mrf.mxu0
    %v449 = vadd.f32 0.0, %v448
    %v450 = vpop.f32.mrf.mxu0
    %v451 = vadd.f32 0.0, %v450
    %452 = vmatmul.bf16.gmra.mxu0 %v257
    %v453 = vpop.f32.mrf.mxu0
    %v454 = vadd.f32 0.0, %v453
    %v455 = vpop.f32.mrf.mxu0
    %v456 = vadd.f32 0.0, %v455
    %457 = vmatmul.bf16.gmra.mxu0 %v259
    %v458 = vpop.f32.mrf.mxu0
    %v459 = vadd.f32 0.0, %v458
    %v460 = vpop.f32.mrf.mxu0
    %v461 = vadd.f32 0.0, %v460
    %462 = vmatmul.bf16.gmra.mxu0 %v261
    %v463 = vpop.f32.mrf.mxu0
    %v464 = vadd.f32 0.0, %v463
    %v465 = vpop.f32.mrf.mxu0
    %v466 = vadd.f32 0.0, %v465
    %467 = vmatmul.bf16.gmra.mxu0 %v263
    %v468 = vpop.f32.mrf.mxu0
    %v469 = vadd.f32 0.0, %v468
    %v470 = vpop.f32.mrf.mxu0
    %v471 = vadd.f32 0.0, %v470
    %472 = vmatmul.bf16.gmra.mxu0 %v265
    %v473 = vpop.f32.mrf.mxu0
    %v474 = vadd.f32 0.0, %v473
    %v475 = vpop.f32.mrf.mxu0
    %v476 = vadd.f32 0.0, %v475
    %477 = vmatmul.bf16.gmra.mxu0 %v267
    %v478 = vpop.f32.mrf.mxu0
    %v479 = vadd.f32 0.0, %v478
    %v480 = vpop.f32.mrf.mxu0
    %v481 = vadd.f32 0.0, %v480
    %482 = vmatmul.bf16.gmra.mxu0 %v269
    %v483 = vpop.f32.mrf.mxu0
    %v484 = vadd.f32 0.0, %v483
    %v485 = vpop.f32.mrf.mxu0
    %v486 = vadd.f32 0.0, %v485
    %487 = vdwg.mxu0
    %488 = vmatpush.bf16.msra.mxu0 %v382
    %489 = vmatpush.bf16.msra.mxu0 %v381
    %490 = vmatpush.bf16.msra.mxu0 %v380
    %491 = vmatpush.bf16.msra.mxu0 %v379
    %492 = vmatpush.bf16.msra.mxu0 %v378
    %493 = vmatpush.bf16.msra.mxu0 %v377
    %494 = vmatpush.bf16.msra.mxu0 %v376
    %495 = vmatpush.bf16.msra.mxu0 %v375
    %496 = vmatmul.bf16.gmra.mxu0 %v240
    %v497 = vpop.f32.mrf.mxu0
    %v498 = vadd.f32 %v409, %v497
    %v499 = vpop.f32.mrf.mxu0
    %v500 = vadd.f32 %v411, %v499
    %501 = vmatmul.bf16.gmra.mxu0 %v242
    %v502 = vpop.f32.mrf.mxu0
    %v503 = vadd.f32 %v414, %v502
    %v504 = vpop.f32.mrf.mxu0
    %v505 = vadd.f32 %v416, %v504
    %506 = vmatmul.bf16.gmra.mxu0 %v244
    %v507 = vpop.f32.mrf.mxu0
    %v508 = vadd.f32 %v419, %v507
    %v509 = vpop.f32.mrf.mxu0
    %v510 = vadd.f32 %v421, %v509
    %511 = vmatmul.bf16.gmra.mxu0 %v246
    %v512 = vpop.f32.mrf.mxu0
    %v513 = vadd.f32 %v424, %v512
    %v514 = vpop.f32.mrf.mxu0
    %v515 = vadd.f32 %v426, %v514
    %516 = vmatmul.bf16.gmra.mxu0 %v248
    %v517 = vpop.f32.mrf.mxu0
    %v518 = vadd.f32 %v429, %v517
    %v519 = vpop.f32.mrf.mxu0
    %v520 = vadd.f32 %v431, %v519
    %521 = vmatmul.bf16.gmra.mxu0 %v250
    %v522 = vpop.f32.mrf.mxu0
    %v523 = vadd.f32 %v434, %v522
    %v524 = vpop.f32.mrf.mxu0
    %v525 = vadd.f32 %v436, %v524
    %526 = vmatmul.bf16.gmra.mxu0 %v252
    %v527 = vpop.f32.mrf.mxu0
    %v528 = vadd.f32 %v439, %v527
    %v529 = vpop.f32.mrf.mxu0
    %v530 = vadd.f32 %v441, %v529
    %531 = vmatmul.bf16.gmra.mxu0 %v254
    %v532 = vpop.f32.mrf.mxu0
    %v533 = vadd.f32 %v444, %v532
    %v534 = vpop.f32.mrf.mxu0
    %v535 = vadd.f32 %v446, %v534
    %536 = vmatmul.bf16.gmra.mxu0 %v256
    %v537 = vpop.f32.mrf.mxu0
    %v538 = vadd.f32 %v449, %v537
    %v539 = vpop.f32.mrf.mxu0
    %v540 = vadd.f32 %v451, %v539
    %541 = vmatmul.bf16.gmra.mxu0 %v258
    %v542 = vpop.f32.mrf.mxu0
    %v543 = vadd.f32 %v454, %v542
    %v544 = vpop.f32.mrf.mxu0
    %v545 = vadd.f32 %v456, %v544
    %546 = vmatmul.bf16.gmra.mxu0 %v260
    %v547 = vpop.f32.mrf.mxu0
    %v548 = vadd.f32 %v459, %v547
    %v549 = vpop.f32.mrf.mxu0
    %v550 = vadd.f32 %v461, %v549
    %551 = vmatmul.bf16.gmra.mxu0 %v262
    %v552 = vpop.f32.mrf.mxu0
    %v553 = vadd.f32 %v464, %v552
    %v554 = vpop.f32.mrf.mxu0
    %v555 = vadd.f32 %v466, %v554
    %556 = vmatmul.bf16.gmra.mxu0 %v264
    %v557 = vpop.f32.mrf.mxu0
    %v558 = vadd.f32 %v469, %v557
    %v559 = vpop.f32.mrf.mxu0
    %v560 = vadd.f32 %v471, %v559
    %561 = vmatmul.bf16.gmra.mxu0 %v266
    %v562 = vpop.f32.mrf.mxu0
    %v563 = vadd.f32 %v474, %v562
    %v564 = vpop.f32.mrf.mxu0
    %v565 = vadd.f32 %v476, %v564
    %566 = vmatmul.bf16.gmra.mxu0 %v268
    %v567 = vpop.f32.mrf.mxu0
    %v568 = vadd.f32 %v479, %v567
    %v569 = vpop.f32.mrf.mxu0
    %v570 = vadd.f32 %v481, %v569
    %571 = vmatmul.bf16.gmra.mxu0 %v270
    %v572 = vpop.f32.mrf.mxu0
    %v573 = vadd.f32 %v484, %v572
    %v574 = vpop.f32.mrf.mxu0
    %v575 = vadd.f32 %v486, %v574
    %576 = vdwg.mxu0
    %v577 = vpack.c.bf16 %v498, %v498
    %v578 = vpack.c.bf16 %v500, %v500
    %v579 = vpack.c.bf16 %v503, %v503
    %v580 = vpack.c.bf16 %v505, %v505
    %v581 = vpack.c.bf16 %v508, %v508
    %v582 = vpack.c.bf16 %v510, %v510
    %v583 = vpack.c.bf16 %v513, %v513
    %v584 = vpack.c.bf16 %v515, %v515
    %v585 = vpack.c.bf16 %v518, %v518
    %v586 = vpack.c.bf16 %v520, %v520
    %v587 = vpack.c.bf16 %v523, %v523
    %v588 = vpack.c.bf16 %v525, %v525
    %v589 = vpack.c.bf16 %v528, %v528
    %v590 = vpack.c.bf16 %v530, %v530
    %v591 = vpack.c.bf16 %v533, %v533
    %v592 = vpack.c.bf16 %v535, %v535
    %v593 = vpack.c.bf16 %v538, %v538
    %v594 = vpack.c.bf16 %v540, %v540
    %v595 = vpack.c.bf16 %v543, %v543
    %v596 = vpack.c.bf16 %v545, %v545
    %v597 = vpack.c.bf16 %v548, %v548
    %v598 = vpack.c.bf16 %v550, %v550
    %v599 = vpack.c.bf16 %v553, %v553
    %v600 = vpack.c.bf16 %v555, %v555
    %v601 = vpack.c.bf16 %v558, %v558
    %v602 = vpack.c.bf16 %v560, %v560
    %v603 = vpack.c.bf16 %v563, %v563
    %v604 = vpack.c.bf16 %v565, %v565
    %v605 = vpack.c.bf16 %v568, %v568
    %v606 = vpack.c.bf16 %v570, %v570
    %v607 = vpack.c.bf16 %v573, %v573
    %v608 = vpack.c.bf16 %v575, %v575
    %v641 = vunpack.c.l.b16 %v577
    %v642 = vunpack.c.l.b16 %v578
    %v643 = vunpack.c.l.b16 %v579
    %v644 = vunpack.c.l.b16 %v580
    %v645 = vunpack.c.l.b16 %v581
    %v646 = vunpack.c.l.b16 %v582
    %v647 = vunpack.c.l.b16 %v583
    %v648 = vunpack.c.l.b16 %v584
    %v649 = vunpack.c.l.b16 %v585
    %v650 = vunpack.c.l.b16 %v586
    %v651 = vunpack.c.l.b16 %v587
    %v652 = vunpack.c.l.b16 %v588
    %v653 = vunpack.c.l.b16 %v589
    %v654 = vunpack.c.l.b16 %v590
    %v655 = vunpack.c.l.b16 %v591
    %v656 = vunpack.c.l.b16 %v592
    %v657 = vunpack.c.l.b16 %v593
    %v658 = vunpack.c.l.b16 %v594
    %v659 = vunpack.c.l.b16 %v595
    %v660 = vunpack.c.l.b16 %v596
    %v661 = vunpack.c.l.b16 %v597
    %v662 = vunpack.c.l.b16 %v598
    %v663 = vunpack.c.l.b16 %v599
    %v664 = vunpack.c.l.b16 %v600
    %v665 = vunpack.c.l.b16 %v601
    %v666 = vunpack.c.l.b16 %v602
    %v667 = vunpack.c.l.b16 %v603
    %v668 = vunpack.c.l.b16 %v604
    %v669 = vunpack.c.l.b16 %v605
    %v670 = vunpack.c.l.b16 %v606
    %v671 = vunpack.c.l.b16 %v607
    %v672 = vunpack.c.l.b16 %v608
    %v673 = vpack.c.b16 %v642, %v641
    %v674 = vpack.c.b16 %v644, %v643
    %v675 = vpack.c.b16 %v646, %v645
    %v676 = vpack.c.b16 %v648, %v647
    %v677 = vpack.c.b16 %v650, %v649
    %v678 = vpack.c.b16 %v652, %v651
    %v679 = vpack.c.b16 %v654, %v653
    %v680 = vpack.c.b16 %v656, %v655
    %v681 = vpack.c.b16 %v658, %v657
    %v682 = vpack.c.b16 %v660, %v659
    %v683 = vpack.c.b16 %v662, %v661
    %v684 = vpack.c.b16 %v664, %v663
    %v685 = vpack.c.b16 %v666, %v665
    %v686 = vpack.c.b16 %v668, %v667
    %v687 = vpack.c.b16 %v670, %v669
    %v688 = vpack.c.b16 %v672, %v671
    %v706 = vperm.slane %v142, 0
    %v740 = vunpack.c.l.b16 %v110
    %v741 = vunpack.c.l.b16 %v111
    %v742 = vunpack.c.l.b16 %v112
    %v743 = vunpack.c.l.b16 %v113
    %v744 = vunpack.c.l.b16 %v114
    %v745 = vunpack.c.l.b16 %v115
    %v746 = vunpack.c.l.b16 %v116
    %v747 = vunpack.c.l.b16 %v117
    %v748 = vunpack.c.l.b16 %v118
    %v749 = vunpack.c.l.b16 %v119
    %v750 = vunpack.c.l.b16 %v120
    %v751 = vunpack.c.l.b16 %v121
    %v752 = vunpack.c.l.b16 %v122
    %v753 = vunpack.c.l.b16 %v123
    %v754 = vunpack.c.l.b16 %v124
    %v755 = vunpack.c.l.b16 %v125
    %v756 = vunpack.c.l.b16 %v126
    %v757 = vunpack.c.l.b16 %v127
    %v758 = vunpack.c.l.b16 %v128
    %v759 = vunpack.c.l.b16 %v129
    %v760 = vunpack.c.l.b16 %v130
    %v761 = vunpack.c.l.b16 %v131
    %v762 = vunpack.c.l.b16 %v132
    %v763 = vunpack.c.l.b16 %v133
    %v764 = vunpack.c.l.b16 %v134
    %v765 = vunpack.c.l.b16 %v135
    %v766 = vunpack.c.l.b16 %v136
    %v767 = vunpack.c.l.b16 %v137
    %v768 = vunpack.c.l.b16 %v138
    %v769 = vunpack.c.l.b16 %v139
    %v770 = vunpack.c.l.b16 %v140
    %v771 = vunpack.c.l.b16 %v141
    %v772 = vpack.c.b16 %v741, %v740
    %v773 = vpack.c.b16 %v743, %v742
    %v774 = vpack.c.b16 %v745, %v744
    %v775 = vpack.c.b16 %v747, %v746
    %v776 = vpack.c.b16 %v749, %v748
    %v777 = vpack.c.b16 %v751, %v750
    %v778 = vpack.c.b16 %v753, %v752
    %v779 = vpack.c.b16 %v755, %v754
    %v780 = vpack.c.b16 %v757, %v756
    %v781 = vpack.c.b16 %v759, %v758
    %v782 = vpack.c.b16 %v761, %v760
    %v783 = vpack.c.b16 %v763, %v762
    %v784 = vpack.c.b16 %v765, %v764
    %v785 = vpack.c.b16 %v767, %v766
    %v786 = vpack.c.b16 %v769, %v768
    %v787 = vpack.c.b16 %v771, %v770
    %804 = vmatpush.bf16.msra.mxu0 %v779
    %805 = vmatpush.bf16.msra.mxu0 %v778
    %806 = vmatpush.bf16.msra.mxu0 %v777
    %807 = vmatpush.bf16.msra.mxu0 %v776
    %808 = vmatpush.bf16.msra.mxu0 %v775
    %809 = vmatpush.bf16.msra.mxu0 %v774
    %810 = vmatpush.bf16.msra.mxu0 %v773
    %811 = vmatpush.bf16.msra.mxu0 %v772
    %812 = vmatmul.bf16.gmra.mxu0 %v673
    %v813 = vpop.f32.mrf.mxu0
    %v814 = vadd.f32 %v706, %v813
    %v815 = vpop.f32.mrf.mxu0
    %v816 = vadd.f32 %v706, %v815
    %817 = vmatmul.bf16.gmra.mxu0 %v674
    %v818 = vpop.f32.mrf.mxu0
    %v819 = vadd.f32 %v706, %v818
    %v820 = vpop.f32.mrf.mxu0
    %v821 = vadd.f32 %v706, %v820
    %822 = vmatmul.bf16.gmra.mxu0 %v675
    %v823 = vpop.f32.mrf.mxu0
    %v824 = vadd.f32 %v706, %v823
    %v825 = vpop.f32.mrf.mxu0
    %v826 = vadd.f32 %v706, %v825
    %827 = vmatmul.bf16.gmra.mxu0 %v676
    %v828 = vpop.f32.mrf.mxu0
    %v829 = vadd.f32 %v706, %v828
    %v830 = vpop.f32.mrf.mxu0
    %v831 = vadd.f32 %v706, %v830
    %832 = vmatmul.bf16.gmra.mxu0 %v677
    %v833 = vpop.f32.mrf.mxu0
    %v834 = vadd.f32 %v706, %v833
    %v835 = vpop.f32.mrf.mxu0
    %v836 = vadd.f32 %v706, %v835
    %837 = vmatmul.bf16.gmra.mxu0 %v678
    %v838 = vpop.f32.mrf.mxu0
    %v839 = vadd.f32 %v706, %v838
    %v840 = vpop.f32.mrf.mxu0
    %v841 = vadd.f32 %v706, %v840
    %842 = vmatmul.bf16.gmra.mxu0 %v679
    %v843 = vpop.f32.mrf.mxu0
    %v844 = vadd.f32 %v706, %v843
    %v845 = vpop.f32.mrf.mxu0
    %v846 = vadd.f32 %v706, %v845
    %847 = vmatmul.bf16.gmra.mxu0 %v680
    %v848 = vpop.f32.mrf.mxu0
    %v849 = vadd.f32 %v706, %v848
    %v850 = vpop.f32.mrf.mxu0
    %v851 = vadd.f32 %v706, %v850
    %852 = vmatmul.bf16.gmra.mxu0 %v681
    %v853 = vpop.f32.mrf.mxu0
    %v854 = vadd.f32 %v706, %v853
    %v855 = vpop.f32.mrf.mxu0
    %v856 = vadd.f32 %v706, %v855
    %857 = vmatmul.bf16.gmra.mxu0 %v682
    %v858 = vpop.f32.mrf.mxu0
    %v859 = vadd.f32 %v706, %v858
    %v860 = vpop.f32.mrf.mxu0
    %v861 = vadd.f32 %v706, %v860
    %862 = vmatmul.bf16.gmra.mxu0 %v683
    %v863 = vpop.f32.mrf.mxu0
    %v864 = vadd.f32 %v706, %v863
    %v865 = vpop.f32.mrf.mxu0
    %v866 = vadd.f32 %v706, %v865
    %867 = vmatmul.bf16.gmra.mxu0 %v684
    %v868 = vpop.f32.mrf.mxu0
    %v869 = vadd.f32 %v706, %v868
    %v870 = vpop.f32.mrf.mxu0
    %v871 = vadd.f32 %v706, %v870
    %872 = vmatmul.bf16.gmra.mxu0 %v685
    %v873 = vpop.f32.mrf.mxu0
    %v874 = vadd.f32 %v706, %v873
    %v875 = vpop.f32.mrf.mxu0
    %v876 = vadd.f32 %v706, %v875
    %877 = vmatmul.bf16.gmra.mxu0 %v686
    %v878 = vpop.f32.mrf.mxu0
    %v879 = vadd.f32 %v706, %v878
    %v880 = vpop.f32.mrf.mxu0
    %v881 = vadd.f32 %v706, %v880
    %882 = vmatmul.bf16.gmra.mxu0 %v687
    %v883 = vpop.f32.mrf.mxu0
    %v884 = vadd.f32 %v706, %v883
    %v885 = vpop.f32.mrf.mxu0
    %v886 = vadd.f32 %v706, %v885
    %887 = vmatmul.bf16.gmra.mxu0 %v688
    %v888 = vpop.f32.mrf.mxu0
    %v889 = vadd.f32 %v706, %v888
    %v890 = vpop.f32.mrf.mxu0
    %v891 = vadd.f32 %v706, %v890
    %892 = vdwg.mxu0
    %893 = vmatpush.bf16.msra.mxu0 %v787
    %894 = vmatpush.bf16.msra.mxu0 %v786
    %895 = vmatpush.bf16.msra.mxu0 %v785
    %896 = vmatpush.bf16.msra.mxu0 %v784
    %897 = vmatpush.bf16.msra.mxu0 %v783
    %898 = vmatpush.bf16.msra.mxu0 %v782
    %899 = vmatpush.bf16.msra.mxu0 %v781
    %900 = vmatpush.bf16.msra.mxu0 %v780
    %901 = vmatmul.bf16.gmra.mxu0 %v367
    %v902 = vpop.f32.mrf.mxu0
    %v903 = vadd.f32 %v814, %v902
    %v904 = vpop.f32.mrf.mxu0
    %v905 = vadd.f32 %v816, %v904
    %906 = vmatmul.bf16.gmra.mxu0 %v368
    %v907 = vpop.f32.mrf.mxu0
    %v908 = vadd.f32 %v819, %v907
    %v909 = vpop.f32.mrf.mxu0
    %v910 = vadd.f32 %v821, %v909
    %911 = vmatmul.bf16.gmra.mxu0 %v369
    %v912 = vpop.f32.mrf.mxu0
    %v913 = vadd.f32 %v824, %v912
    %v914 = vpop.f32.mrf.mxu0
    %v915 = vadd.f32 %v826, %v914
    %916 = vmatmul.bf16.gmra.mxu0 %v370
    %v917 = vpop.f32.mrf.mxu0
    %v918 = vadd.f32 %v829, %v917
    %v919 = vpop.f32.mrf.mxu0
    %v920 = vadd.f32 %v831, %v919
    %921 = vmatmul.bf16.gmra.mxu0 %v371
    %v922 = vpop.f32.mrf.mxu0
    %v923 = vadd.f32 %v834, %v922
    %v924 = vpop.f32.mrf.mxu0
    %v925 = vadd.f32 %v836, %v924
    %926 = vmatmul.bf16.gmra.mxu0 %v372
    %v927 = vpop.f32.mrf.mxu0
    %v928 = vadd.f32 %v839, %v927
    %v929 = vpop.f32.mrf.mxu0
    %v930 = vadd.f32 %v841, %v929
    %931 = vmatmul.bf16.gmra.mxu0 %v373
    %v932 = vpop.f32.mrf.mxu0
    %v933 = vadd.f32 %v844, %v932
    %v934 = vpop.f32.mrf.mxu0
    %v935 = vadd.f32 %v846, %v934
    %936 = vmatmul.bf16.gmra.mxu0 %v374
    %v937 = vpop.f32.mrf.mxu0
    %v938 = vadd.f32 %v849, %v937
    %v939 = vpop.f32.mrf.mxu0
    %v940 = vadd.f32 %v851, %v939
    %941 = vmatmul.bf16.gmra.mxu0 %v375
    %v942 = vpop.f32.mrf.mxu0
    %v943 = vadd.f32 %v854, %v942
    %v944 = vpop.f32.mrf.mxu0
    %v945 = vadd.f32 %v856, %v944
    %946 = vmatmul.bf16.gmra.mxu0 %v376
    %v947 = vpop.f32.mrf.mxu0
    %v948 = vadd.f32 %v859, %v947
    %v949 = vpop.f32.mrf.mxu0
    %v950 = vadd.f32 %v861, %v949
    %951 = vmatmul.bf16.gmra.mxu0 %v377
    %v952 = vpop.f32.mrf.mxu0
    %v953 = vadd.f32 %v864, %v952
    %v954 = vpop.f32.mrf.mxu0
    %v955 = vadd.f32 %v866, %v954
    %956 = vmatmul.bf16.gmra.mxu0 %v378
    %v957 = vpop.f32.mrf.mxu0
    %v958 = vadd.f32 %v869, %v957
    %v959 = vpop.f32.mrf.mxu0
    %v960 = vadd.f32 %v871, %v959
    %961 = vmatmul.bf16.gmra.mxu0 %v379
    %v962 = vpop.f32.mrf.mxu0
    %v963 = vadd.f32 %v874, %v962
    %v964 = vpop.f32.mrf.mxu0
    %v965 = vadd.f32 %v876, %v964
    %966 = vmatmul.bf16.gmra.mxu0 %v380
    %v967 = vpop.f32.mrf.mxu0
    %v968 = vadd.f32 %v879, %v967
    %v969 = vpop.f32.mrf.mxu0
    %v970 = vadd.f32 %v881, %v969
    %971 = vmatmul.bf16.gmra.mxu0 %v381
    %v972 = vpop.f32.mrf.mxu0
    %v973 = vadd.f32 %v884, %v972
    %v974 = vpop.f32.mrf.mxu0
    %v975 = vadd.f32 %v886, %v974
    %976 = vmatmul.bf16.gmra.mxu0 %v382
    %v977 = vpop.f32.mrf.mxu0
    %v978 = vadd.f32 %v889, %v977
    %v979 = vpop.f32.mrf.mxu0
    %v980 = vadd.f32 %v891, %v979
    %981 = vdwg.mxu0
    %v982 = vmax.f32 %v903, 0.0
    %v983 = vmax.f32 %v905, 0.0
    %v984 = vmax.f32 %v908, 0.0
    %v985 = vmax.f32 %v910, 0.0
    %v986 = vmax.f32 %v913, 0.0
    %v987 = vmax.f32 %v915, 0.0
    %v988 = vmax.f32 %v918, 0.0
    %v989 = vmax.f32 %v920, 0.0
    %v990 = vmax.f32 %v923, 0.0
    %v991 = vmax.f32 %v925, 0.0
    %v992 = vmax.f32 %v928, 0.0
    %v993 = vmax.f32 %v930, 0.0
    %v994 = vmax.f32 %v933, 0.0
    %v995 = vmax.f32 %v935, 0.0
    %v996 = vmax.f32 %v938, 0.0
    %v997 = vmax.f32 %v940, 0.0
    %v998 = vmax.f32 %v943, 0.0
    %v999 = vmax.f32 %v945, 0.0
    %v1000 = vmax.f32 %v948, 0.0
    %v1001 = vmax.f32 %v950, 0.0
    %v1002 = vmax.f32 %v953, 0.0
    %v1003 = vmax.f32 %v955, 0.0
    %v1004 = vmax.f32 %v958, 0.0
    %v1005 = vmax.f32 %v960, 0.0
    %v1006 = vmax.f32 %v963, 0.0
    %v1007 = vmax.f32 %v965, 0.0
    %v1008 = vmax.f32 %v968, 0.0
    %v1009 = vmax.f32 %v970, 0.0
    %v1010 = vmax.f32 %v973, 0.0
    %v1011 = vmax.f32 %v975, 0.0
    %v1012 = vmax.f32 %v978, 0.0
    %v1013 = vmax.f32 %v980, 0.0
    %v1014 = vpack.c.bf16 %v982, %v982
    %v1015 = vpack.c.bf16 %v983, %v983
    %v1016 = vpack.c.bf16 %v984, %v984
    %v1017 = vpack.c.bf16 %v985, %v985
    %v1018 = vpack.c.bf16 %v986, %v986
    %v1019 = vpack.c.bf16 %v987, %v987
    %v1020 = vpack.c.bf16 %v988, %v988
    %v1021 = vpack.c.bf16 %v989, %v989
    %v1022 = vpack.c.bf16 %v990, %v990
    %v1023 = vpack.c.bf16 %v991, %v991
    %v1024 = vpack.c.bf16 %v992, %v992
    %v1025 = vpack.c.bf16 %v993, %v993
    %v1026 = vpack.c.bf16 %v994, %v994
    %v1027 = vpack.c.bf16 %v995, %v995
    %v1028 = vpack.c.bf16 %v996, %v996
    %v1029 = vpack.c.bf16 %v997, %v997
    %v1030 = vpack.c.bf16 %v998, %v998
    %v1031 = vpack.c.bf16 %v999, %v999
    %v1032 = vpack.c.bf16 %v1000, %v1000
    %v1033 = vpack.c.bf16 %v1001, %v1001
    %v1034 = vpack.c.bf16 %v1002, %v1002
    %v1035 = vpack.c.bf16 %v1003, %v1003
    %v1036 = vpack.c.bf16 %v1004, %v1004
    %v1037 = vpack.c.bf16 %v1005, %v1005
    %v1038 = vpack.c.bf16 %v1006, %v1006
    %v1039 = vpack.c.bf16 %v1007, %v1007
    %v1040 = vpack.c.bf16 %v1008, %v1008
    %v1041 = vpack.c.bf16 %v1009, %v1009
    %v1042 = vpack.c.bf16 %v1010, %v1010
    %v1043 = vpack.c.bf16 %v1011, %v1011
    %v1044 = vpack.c.bf16 %v1012, %v1012
    %v1045 = vpack.c.bf16 %v1013, %v1013
    %v1046 = vld [vmem:[%s5] sm:$0xf]
    %v1047 = vld [vmem:[%s5 + $0x4] sm:$0xf]
    %v1048 = vld [vmem:[%s5 + $0x8] sm:$0xf]
    %v1049 = vld [vmem:[%s5 + $0xc] sm:$0xf]
    %v1050 = vld [vmem:[%s5 + $0x10] sm:$0xf]
    %v1051 = vld [vmem:[%s5 + $0x14] sm:$0xf]
    %v1052 = vld [vmem:[%s5 + $0x18] sm:$0xf]
    %v1053 = vld [vmem:[%s5 + $0x1c] sm:$0xf]
    %v1054 = vld [vmem:[%s5 + $0x20] sm:$0xf]
    %v1055 = vld [vmem:[%s5 + $0x24] sm:$0xf]
    %v1056 = vld [vmem:[%s5 + $0x28] sm:$0xf]
    %v1057 = vld [vmem:[%s5 + $0x2c] sm:$0xf]
    %v1058 = vld [vmem:[%s5 + $0x30] sm:$0xf]
    %v1059 = vld [vmem:[%s5 + $0x34] sm:$0xf]
    %v1060 = vld [vmem:[%s5 + $0x38] sm:$0xf]
    %v1061 = vld [vmem:[%s5 + $0x3c] sm:$0xf]
    %v1062 = vld [vmem:[%s5 + $0x40] sm:$0xf]
    %v1063 = vld [vmem:[%s5 + $0x44] sm:$0xf]
    %v1064 = vld [vmem:[%s5 + $0x48] sm:$0xf]
    %v1065 = vld [vmem:[%s5 + $0x4c] sm:$0xf]
    %v1066 = vld [vmem:[%s5 + $0x50] sm:$0xf]
    %v1067 = vld [vmem:[%s5 + $0x54] sm:$0xf]
    %v1068 = vld [vmem:[%s5 + $0x58] sm:$0xf]
    %v1069 = vld [vmem:[%s5 + $0x5c] sm:$0xf]
    %v1070 = vld [vmem:[%s5 + $0x60] sm:$0xf]
    %v1071 = vld [vmem:[%s5 + $0x64] sm:$0xf]
    %v1072 = vld [vmem:[%s5 + $0x68] sm:$0xf]
    %v1073 = vld [vmem:[%s5 + $0x6c] sm:$0xf]
    %v1074 = vld [vmem:[%s5 + $0x70] sm:$0xf]
    %v1075 = vld [vmem:[%s5 + $0x74] sm:$0xf]
    %v1076 = vld [vmem:[%s5 + $0x78] sm:$0xf]
    %v1077 = vld [vmem:[%s5 + $0x7c] sm:$0xf]
    %v1078 = vld [vmem:[%s6] sm:$0x1]
    %v1111 = vunpack.c.l.b16 %v1014
    %v1112 = vunpack.c.l.b16 %v1015
    %v1113 = vunpack.c.l.b16 %v1016
    %v1114 = vunpack.c.l.b16 %v1017
    %v1115 = vunpack.c.l.b16 %v1018
    %v1116 = vunpack.c.l.b16 %v1019
    %v1117 = vunpack.c.l.b16 %v1020
    %v1118 = vunpack.c.l.b16 %v1021
    %v1119 = vunpack.c.l.b16 %v1022
    %v1120 = vunpack.c.l.b16 %v1023
    %v1121 = vunpack.c.l.b16 %v1024
    %v1122 = vunpack.c.l.b16 %v1025
    %v1123 = vunpack.c.l.b16 %v1026
    %v1124 = vunpack.c.l.b16 %v1027
    %v1125 = vunpack.c.l.b16 %v1028
    %v1126 = vunpack.c.l.b16 %v1029
    %v1127 = vunpack.c.l.b16 %v1030
    %v1128 = vunpack.c.l.b16 %v1031
    %v1129 = vunpack.c.l.b16 %v1032
    %v1130 = vunpack.c.l.b16 %v1033
    %v1131 = vunpack.c.l.b16 %v1034
    %v1132 = vunpack.c.l.b16 %v1035
    %v1133 = vunpack.c.l.b16 %v1036
    %v1134 = vunpack.c.l.b16 %v1037
    %v1135 = vunpack.c.l.b16 %v1038
    %v1136 = vunpack.c.l.b16 %v1039
    %v1137 = vunpack.c.l.b16 %v1040
    %v1138 = vunpack.c.l.b16 %v1041
    %v1139 = vunpack.c.l.b16 %v1042
    %v1140 = vunpack.c.l.b16 %v1043
    %v1141 = vunpack.c.l.b16 %v1044
    %v1142 = vunpack.c.l.b16 %v1045
    %v1143 = vpack.c.b16 %v1112, %v1111
    %v1144 = vpack.c.b16 %v1114, %v1113
    %v1145 = vpack.c.b16 %v1116, %v1115
    %v1146 = vpack.c.b16 %v1118, %v1117
    %v1147 = vpack.c.b16 %v1120, %v1119
    %v1148 = vpack.c.b16 %v1122, %v1121
    %v1149 = vpack.c.b16 %v1124, %v1123
    %v1150 = vpack.c.b16 %v1126, %v1125
    %v1151 = vpack.c.b16 %v1128, %v1127
    %v1152 = vpack.c.b16 %v1130, %v1129
    %v1153 = vpack.c.b16 %v1132, %v1131
    %v1154 = vpack.c.b16 %v1134, %v1133
    %v1155 = vpack.c.b16 %v1136, %v1135
    %v1156 = vpack.c.b16 %v1138, %v1137
    %v1157 = vpack.c.b16 %v1140, %v1139
    %v1158 = vpack.c.b16 %v1142, %v1141
    %1175 = vmatpush.bf16.msra.mxu0 %v1150
    %1176 = vmatpush.bf16.msra.mxu0 %v1149
    %1177 = vmatpush.bf16.msra.mxu0 %v1148
    %1178 = vmatpush.bf16.msra.mxu0 %v1147
    %1179 = vmatpush.bf16.msra.mxu0 %v1146
    %1180 = vmatpush.bf16.msra.mxu0 %v1145
    %1181 = vmatpush.bf16.msra.mxu0 %v1144
    %1182 = vmatpush.bf16.msra.mxu0 %v1143
    %1183 = vmatmul.bf16.gmra.mxu0 %v239
    %v1184 = vpop.f32.mrf.mxu0
    %v1185 = vadd.f32 0.0, %v1184
    %v1186 = vpop.f32.mrf.mxu0
    %v1187 = vadd.f32 0.0, %v1186
    %1188 = vmatmul.bf16.gmra.mxu0 %v241
    %v1189 = vpop.f32.mrf.mxu0
    %v1190 = vadd.f32 0.0, %v1189
    %v1191 = vpop.f32.mrf.mxu0
    %v1192 = vadd.f32 0.0, %v1191
    %1193 = vmatmul.bf16.gmra.mxu0 %v243
    %v1194 = vpop.f32.mrf.mxu0
    %v1195 = vadd.f32 0.0, %v1194
    %v1196 = vpop.f32.mrf.mxu0
    %v1197 = vadd.f32 0.0, %v1196
    %1198 = vmatmul.bf16.gmra.mxu0 %v245
    %v1199 = vpop.f32.mrf.mxu0
    %v1200 = vadd.f32 0.0, %v1199
    %v1201 = vpop.f32.mrf.mxu0
    %v1202 = vadd.f32 0.0, %v1201
    %1203 = vmatmul.bf16.gmra.mxu0 %v247
    %v1204 = vpop.f32.mrf.mxu0
    %v1205 = vadd.f32 0.0, %v1204
    %v1206 = vpop.f32.mrf.mxu0
    %v1207 = vadd.f32 0.0, %v1206
    %1208 = vmatmul.bf16.gmra.mxu0 %v249
    %v1209 = vpop.f32.mrf.mxu0
    %v1210 = vadd.f32 0.0, %v1209
    %v1211 = vpop.f32.mrf.mxu0
    %v1212 = vadd.f32 0.0, %v1211
    %1213 = vmatmul.bf16.gmra.mxu0 %v251
    %v1214 = vpop.f32.mrf.mxu0
    %v1215 = vadd.f32 0.0, %v1214
    %v1216 = vpop.f32.mrf.mxu0
    %v1217 = vadd.f32 0.0, %v1216
    %1218 = vmatmul.bf16.gmra.mxu0 %v253
    %v1219 = vpop.f32.mrf.mxu0
    %v1220 = vadd.f32 0.0, %v1219
    %v1221 = vpop.f32.mrf.mxu0
    %v1222 = vadd.f32 0.0, %v1221
    %1223 = vmatmul.bf16.gmra.mxu0 %v255
    %v1224 = vpop.f32.mrf.mxu0
    %v1225 = vadd.f32 0.0, %v1224
    %v1226 = vpop.f32.mrf.mxu0
    %v1227 = vadd.f32 0.0, %v1226
    %1228 = vmatmul.bf16.gmra.mxu0 %v257
    %v1229 = vpop.f32.mrf.mxu0
    %v1230 = vadd.f32 0.0, %v1229
    %v1231 = vpop.f32.mrf.mxu0
    %v1232 = vadd.f32 0.0, %v1231
    %1233 = vmatmul.bf16.gmra.mxu0 %v259
    %v1234 = vpop.f32.mrf.mxu0
    %v1235 = vadd.f32 0.0, %v1234
    %v1236 = vpop.f32.mrf.mxu0
    %v1237 = vadd.f32 0.0, %v1236
    %1238 = vmatmul.bf16.gmra.mxu0 %v261
    %v1239 = vpop.f32.mrf.mxu0
    %v1240 = vadd.f32 0.0, %v1239
    %v1241 = vpop.f32.mrf.mxu0
    %v1242 = vadd.f32 0.0, %v1241
    %1243 = vmatmul.bf16.gmra.mxu0 %v263
    %v1244 = vpop.f32.mrf.mxu0
    %v1245 = vadd.f32 0.0, %v1244
    %v1246 = vpop.f32.mrf.mxu0
    %v1247 = vadd.f32 0.0, %v1246
    %1248 = vmatmul.bf16.gmra.mxu0 %v265
    %v1249 = vpop.f32.mrf.mxu0
    %v1250 = vadd.f32 0.0, %v1249
    %v1251 = vpop.f32.mrf.mxu0
    %v1252 = vadd.f32 0.0, %v1251
    %1253 = vmatmul.bf16.gmra.mxu0 %v267
    %v1254 = vpop.f32.mrf.mxu0
    %v1255 = vadd.f32 0.0, %v1254
    %v1256 = vpop.f32.mrf.mxu0
    %v1257 = vadd.f32 0.0, %v1256
    %1258 = vmatmul.bf16.gmra.mxu0 %v269
    %v1259 = vpop.f32.mrf.mxu0
    %v1260 = vadd.f32 0.0, %v1259
    %v1261 = vpop.f32.mrf.mxu0
    %v1262 = vadd.f32 0.0, %v1261
    %1263 = vdwg.mxu0
    %1264 = vmatpush.bf16.msra.mxu0 %v1158
    %1265 = vmatpush.bf16.msra.mxu0 %v1157
    %1266 = vmatpush.bf16.msra.mxu0 %v1156
    %1267 = vmatpush.bf16.msra.mxu0 %v1155
    %1268 = vmatpush.bf16.msra.mxu0 %v1154
    %1269 = vmatpush.bf16.msra.mxu0 %v1153
    %1270 = vmatpush.bf16.msra.mxu0 %v1152
    %1271 = vmatpush.bf16.msra.mxu0 %v1151
    %1272 = vmatmul.bf16.gmra.mxu0 %v240
    %v1273 = vpop.f32.mrf.mxu0
    %v1274 = vadd.f32 %v1185, %v1273
    %v1275 = vpop.f32.mrf.mxu0
    %v1276 = vadd.f32 %v1187, %v1275
    %1277 = vmatmul.bf16.gmra.mxu0 %v242
    %v1278 = vpop.f32.mrf.mxu0
    %v1279 = vadd.f32 %v1190, %v1278
    %v1280 = vpop.f32.mrf.mxu0
    %v1281 = vadd.f32 %v1192, %v1280
    %1282 = vmatmul.bf16.gmra.mxu0 %v244
    %v1283 = vpop.f32.mrf.mxu0
    %v1284 = vadd.f32 %v1195, %v1283
    %v1285 = vpop.f32.mrf.mxu0
    %v1286 = vadd.f32 %v1197, %v1285
    %1287 = vmatmul.bf16.gmra.mxu0 %v246
    %v1288 = vpop.f32.mrf.mxu0
    %v1289 = vadd.f32 %v1200, %v1288
    %v1290 = vpop.f32.mrf.mxu0
    %v1291 = vadd.f32 %v1202, %v1290
    %1292 = vmatmul.bf16.gmra.mxu0 %v248
    %v1293 = vpop.f32.mrf.mxu0
    %v1294 = vadd.f32 %v1205, %v1293
    %v1295 = vpop.f32.mrf.mxu0
    %v1296 = vadd.f32 %v1207, %v1295
    %1297 = vmatmul.bf16.gmra.mxu0 %v250
    %v1298 = vpop.f32.mrf.mxu0
    %v1299 = vadd.f32 %v1210, %v1298
    %v1300 = vpop.f32.mrf.mxu0
    %v1301 = vadd.f32 %v1212, %v1300
    %1302 = vmatmul.bf16.gmra.mxu0 %v252
    %v1303 = vpop.f32.mrf.mxu0
    %v1304 = vadd.f32 %v1215, %v1303
    %v1305 = vpop.f32.mrf.mxu0
    %v1306 = vadd.f32 %v1217, %v1305
    %1307 = vmatmul.bf16.gmra.mxu0 %v254
    %v1308 = vpop.f32.mrf.mxu0
    %v1309 = vadd.f32 %v1220, %v1308
    %v1310 = vpop.f32.mrf.mxu0
    %v1311 = vadd.f32 %v1222, %v1310
    %1312 = vmatmul.bf16.gmra.mxu0 %v256
    %v1313 = vpop.f32.mrf.mxu0
    %v1314 = vadd.f32 %v1225, %v1313
    %v1315 = vpop.f32.mrf.mxu0
    %v1316 = vadd.f32 %v1227, %v1315
    %1317 = vmatmul.bf16.gmra.mxu0 %v258
    %v1318 = vpop.f32.mrf.mxu0
    %v1319 = vadd.f32 %v1230, %v1318
    %v1320 = vpop.f32.mrf.mxu0
    %v1321 = vadd.f32 %v1232, %v1320
    %1322 = vmatmul.bf16.gmra.mxu0 %v260
    %v1323 = vpop.f32.mrf.mxu0
    %v1324 = vadd.f32 %v1235, %v1323
    %v1325 = vpop.f32.mrf.mxu0
    %v1326 = vadd.f32 %v1237, %v1325
    %1327 = vmatmul.bf16.gmra.mxu0 %v262
    %v1328 = vpop.f32.mrf.mxu0
    %v1329 = vadd.f32 %v1240, %v1328
    %v1330 = vpop.f32.mrf.mxu0
    %v1331 = vadd.f32 %v1242, %v1330
    %1332 = vmatmul.bf16.gmra.mxu0 %v264
    %v1333 = vpop.f32.mrf.mxu0
    %v1334 = vadd.f32 %v1245, %v1333
    %v1335 = vpop.f32.mrf.mxu0
    %v1336 = vadd.f32 %v1247, %v1335
    %1337 = vmatmul.bf16.gmra.mxu0 %v266
    %v1338 = vpop.f32.mrf.mxu0
    %v1339 = vadd.f32 %v1250, %v1338
    %v1340 = vpop.f32.mrf.mxu0
    %v1341 = vadd.f32 %v1252, %v1340
    %1342 = vmatmul.bf16.gmra.mxu0 %v268
    %v1343 = vpop.f32.mrf.mxu0
    %v1344 = vadd.f32 %v1255, %v1343
    %v1345 = vpop.f32.mrf.mxu0
    %v1346 = vadd.f32 %v1257, %v1345
    %1347 = vmatmul.bf16.gmra.mxu0 %v270
    %v1348 = vpop.f32.mrf.mxu0
    %v1349 = vadd.f32 %v1260, %v1348
    %v1350 = vpop.f32.mrf.mxu0
    %v1351 = vadd.f32 %v1262, %v1350
    %1352 = vdwg.mxu0
    %v1353 = vpack.c.bf16 %v1274, %v1274
    %v1354 = vpack.c.bf16 %v1276, %v1276
    %v1355 = vpack.c.bf16 %v1279, %v1279
    %v1356 = vpack.c.bf16 %v1281, %v1281
    %v1357 = vpack.c.bf16 %v1284, %v1284
    %v1358 = vpack.c.bf16 %v1286, %v1286
    %v1359 = vpack.c.bf16 %v1289, %v1289
    %v1360 = vpack.c.bf16 %v1291, %v1291
    %v1361 = vpack.c.bf16 %v1294, %v1294
    %v1362 = vpack.c.bf16 %v1296, %v1296
    %v1363 = vpack.c.bf16 %v1299, %v1299
    %v1364 = vpack.c.bf16 %v1301, %v1301
    %v1365 = vpack.c.bf16 %v1304, %v1304
    %v1366 = vpack.c.bf16 %v1306, %v1306
    %v1367 = vpack.c.bf16 %v1309, %v1309
    %v1368 = vpack.c.bf16 %v1311, %v1311
    %v1369 = vpack.c.bf16 %v1314, %v1314
    %v1370 = vpack.c.bf16 %v1316, %v1316
    %v1371 = vpack.c.bf16 %v1319, %v1319
    %v1372 = vpack.c.bf16 %v1321, %v1321
    %v1373 = vpack.c.bf16 %v1324, %v1324
    %v1374 = vpack.c.bf16 %v1326, %v1326
    %v1375 = vpack.c.bf16 %v1329, %v1329
    %v1376 = vpack.c.bf16 %v1331, %v1331
    %v1377 = vpack.c.bf16 %v1334, %v1334
    %v1378 = vpack.c.bf16 %v1336, %v1336
    %v1379 = vpack.c.bf16 %v1339, %v1339
    %v1380 = vpack.c.bf16 %v1341, %v1341
    %v1381 = vpack.c.bf16 %v1344, %v1344
    %v1382 = vpack.c.bf16 %v1346, %v1346
    %v1383 = vpack.c.bf16 %v1349, %v1349
    %v1384 = vpack.c.bf16 %v1351, %v1351
    %v1417 = vunpack.c.l.b16 %v1353
    %v1418 = vunpack.c.l.b16 %v1354
    %v1419 = vunpack.c.l.b16 %v1355
    %v1420 = vunpack.c.l.b16 %v1356
    %v1421 = vunpack.c.l.b16 %v1357
    %v1422 = vunpack.c.l.b16 %v1358
    %v1423 = vunpack.c.l.b16 %v1359
    %v1424 = vunpack.c.l.b16 %v1360
    %v1425 = vunpack.c.l.b16 %v1361
    %v1426 = vunpack.c.l.b16 %v1362
    %v1427 = vunpack.c.l.b16 %v1363
    %v1428 = vunpack.c.l.b16 %v1364
    %v1429 = vunpack.c.l.b16 %v1365
    %v1430 = vunpack.c.l.b16 %v1366
    %v1431 = vunpack.c.l.b16 %v1367
    %v1432 = vunpack.c.l.b16 %v1368
    %v1433 = vunpack.c.l.b16 %v1369
    %v1434 = vunpack.c.l.b16 %v1370
    %v1435 = vunpack.c.l.b16 %v1371
    %v1436 = vunpack.c.l.b16 %v1372
    %v1437 = vunpack.c.l.b16 %v1373
    %v1438 = vunpack.c.l.b16 %v1374
    %v1439 = vunpack.c.l.b16 %v1375
    %v1440 = vunpack.c.l.b16 %v1376
    %v1441 = vunpack.c.l.b16 %v1377
    %v1442 = vunpack.c.l.b16 %v1378
    %v1443 = vunpack.c.l.b16 %v1379
    %v1444 = vunpack.c.l.b16 %v1380
    %v1445 = vunpack.c.l.b16 %v1381
    %v1446 = vunpack.c.l.b16 %v1382
    %v1447 = vunpack.c.l.b16 %v1383
    %v1448 = vunpack.c.l.b16 %v1384
    %v1449 = vpack.c.b16 %v1418, %v1417
    %v1450 = vpack.c.b16 %v1420, %v1419
    %v1451 = vpack.c.b16 %v1422, %v1421
    %v1452 = vpack.c.b16 %v1424, %v1423
    %v1453 = vpack.c.b16 %v1426, %v1425
    %v1454 = vpack.c.b16 %v1428, %v1427
    %v1455 = vpack.c.b16 %v1430, %v1429
    %v1456 = vpack.c.b16 %v1432, %v1431
    %v1457 = vpack.c.b16 %v1434, %v1433
    %v1458 = vpack.c.b16 %v1436, %v1435
    %v1459 = vpack.c.b16 %v1438, %v1437
    %v1460 = vpack.c.b16 %v1440, %v1439
    %v1461 = vpack.c.b16 %v1442, %v1441
    %v1462 = vpack.c.b16 %v1444, %v1443
    %v1463 = vpack.c.b16 %v1446, %v1445
    %v1464 = vpack.c.b16 %v1448, %v1447
    %v1482 = vperm.slane %v1078, 0
    %v1516 = vunpack.c.l.b16 %v1046
    %v1517 = vunpack.c.l.b16 %v1047
    %v1518 = vunpack.c.l.b16 %v1048
    %v1519 = vunpack.c.l.b16 %v1049
    %v1520 = vunpack.c.l.b16 %v1050
    %v1521 = vunpack.c.l.b16 %v1051
    %v1522 = vunpack.c.l.b16 %v1052
    %v1523 = vunpack.c.l.b16 %v1053
    %v1524 = vunpack.c.l.b16 %v1054
    %v1525 = vunpack.c.l.b16 %v1055
    %v1526 = vunpack.c.l.b16 %v1056
    %v1527 = vunpack.c.l.b16 %v1057
    %v1528 = vunpack.c.l.b16 %v1058
    %v1529 = vunpack.c.l.b16 %v1059
    %v1530 = vunpack.c.l.b16 %v1060
    %v1531 = vunpack.c.l.b16 %v1061
    %v1532 = vunpack.c.l.b16 %v1062
    %v1533 = vunpack.c.l.b16 %v1063
    %v1534 = vunpack.c.l.b16 %v1064
    %v1535 = vunpack.c.l.b16 %v1065
    %v1536 = vunpack.c.l.b16 %v1066
    %v1537 = vunpack.c.l.b16 %v1067
    %v1538 = vunpack.c.l.b16 %v1068
    %v1539 = vunpack.c.l.b16 %v1069
    %v1540 = vunpack.c.l.b16 %v1070
    %v1541 = vunpack.c.l.b16 %v1071
    %v1542 = vunpack.c.l.b16 %v1072
    %v1543 = vunpack.c.l.b16 %v1073
    %v1544 = vunpack.c.l.b16 %v1074
    %v1545 = vunpack.c.l.b16 %v1075
    %v1546 = vunpack.c.l.b16 %v1076
    %v1547 = vunpack.c.l.b16 %v1077
    %v1548 = vpack.c.b16 %v1517, %v1516
    %v1549 = vpack.c.b16 %v1519, %v1518
    %v1550 = vpack.c.b16 %v1521, %v1520
    %v1551 = vpack.c.b16 %v1523, %v1522
    %v1552 = vpack.c.b16 %v1525, %v1524
    %v1553 = vpack.c.b16 %v1527, %v1526
    %v1554 = vpack.c.b16 %v1529, %v1528
    %v1555 = vpack.c.b16 %v1531, %v1530
    %v1556 = vpack.c.b16 %v1533, %v1532
    %v1557 = vpack.c.b16 %v1535, %v1534
    %v1558 = vpack.c.b16 %v1537, %v1536
    %v1559 = vpack.c.b16 %v1539, %v1538
    %v1560 = vpack.c.b16 %v1541, %v1540
    %v1561 = vpack.c.b16 %v1543, %v1542
    %v1562 = vpack.c.b16 %v1545, %v1544
    %v1563 = vpack.c.b16 %v1547, %v1546
    %1580 = vmatpush.bf16.msra.mxu0 %v1555
    %1581 = vmatpush.bf16.msra.mxu0 %v1554
    %1582 = vmatpush.bf16.msra.mxu0 %v1553
    %1583 = vmatpush.bf16.msra.mxu0 %v1552
    %1584 = vmatpush.bf16.msra.mxu0 %v1551
    %1585 = vmatpush.bf16.msra.mxu0 %v1550
    %1586 = vmatpush.bf16.msra.mxu0 %v1549
    %1587 = vmatpush.bf16.msra.mxu0 %v1548
    %1588 = vmatmul.bf16.gmra.mxu0 %v1449
    %v1589 = vpop.f32.mrf.mxu0
    %v1590 = vadd.f32 %v1482, %v1589
    %v1591 = vpop.f32.mrf.mxu0
    %v1592 = vadd.f32 %v1482, %v1591
    %1593 = vmatmul.bf16.gmra.mxu0 %v1450
    %v1594 = vpop.f32.mrf.mxu0
    %v1595 = vadd.f32 %v1482, %v1594
    %v1596 = vpop.f32.mrf.mxu0
    %v1597 = vadd.f32 %v1482, %v1596
    %1598 = vmatmul.bf16.gmra.mxu0 %v1451
    %v1599 = vpop.f32.mrf.mxu0
    %v1600 = vadd.f32 %v1482, %v1599
    %v1601 = vpop.f32.mrf.mxu0
    %v1602 = vadd.f32 %v1482, %v1601
    %1603 = vmatmul.bf16.gmra.mxu0 %v1452
    %v1604 = vpop.f32.mrf.mxu0
    %v1605 = vadd.f32 %v1482, %v1604
    %v1606 = vpop.f32.mrf.mxu0
    %v1607 = vadd.f32 %v1482, %v1606
    %1608 = vmatmul.bf16.gmra.mxu0 %v1453
    %v1609 = vpop.f32.mrf.mxu0
    %v1610 = vadd.f32 %v1482, %v1609
    %v1611 = vpop.f32.mrf.mxu0
    %v1612 = vadd.f32 %v1482, %v1611
    %1613 = vmatmul.bf16.gmra.mxu0 %v1454
    %v1614 = vpop.f32.mrf.mxu0
    %v1615 = vadd.f32 %v1482, %v1614
    %v1616 = vpop.f32.mrf.mxu0
    %v1617 = vadd.f32 %v1482, %v1616
    %1618 = vmatmul.bf16.gmra.mxu0 %v1455
    %v1619 = vpop.f32.mrf.mxu0
    %v1620 = vadd.f32 %v1482, %v1619
    %v1621 = vpop.f32.mrf.mxu0
    %v1622 = vadd.f32 %v1482, %v1621
    %1623 = vmatmul.bf16.gmra.mxu0 %v1456
    %v1624 = vpop.f32.mrf.mxu0
    %v1625 = vadd.f32 %v1482, %v1624
    %v1626 = vpop.f32.mrf.mxu0
    %v1627 = vadd.f32 %v1482, %v1626
    %1628 = vmatmul.bf16.gmra.mxu0 %v1457
    %v1629 = vpop.f32.mrf.mxu0
    %v1630 = vadd.f32 %v1482, %v1629
    %v1631 = vpop.f32.mrf.mxu0
    %v1632 = vadd.f32 %v1482, %v1631
    %1633 = vmatmul.bf16.gmra.mxu0 %v1458
    %v1634 = vpop.f32.mrf.mxu0
    %v1635 = vadd.f32 %v1482, %v1634
    %v1636 = vpop.f32.mrf.mxu0
    %v1637 = vadd.f32 %v1482, %v1636
    %1638 = vmatmul.bf16.gmra.mxu0 %v1459
    %v1639 = vpop.f32.mrf.mxu0
    %v1640 = vadd.f32 %v1482, %v1639
    %v1641 = vpop.f32.mrf.mxu0
    %v1642 = vadd.f32 %v1482, %v1641
    %1643 = vmatmul.bf16.gmra.mxu0 %v1460
    %v1644 = vpop.f32.mrf.mxu0
    %v1645 = vadd.f32 %v1482, %v1644
    %v1646 = vpop.f32.mrf.mxu0
    %v1647 = vadd.f32 %v1482, %v1646
    %1648 = vmatmul.bf16.gmra.mxu0 %v1461
    %v1649 = vpop.f32.mrf.mxu0
    %v1650 = vadd.f32 %v1482, %v1649
    %v1651 = vpop.f32.mrf.mxu0
    %v1652 = vadd.f32 %v1482, %v1651
    %1653 = vmatmul.bf16.gmra.mxu0 %v1462
    %v1654 = vpop.f32.mrf.mxu0
    %v1655 = vadd.f32 %v1482, %v1654
    %v1656 = vpop.f32.mrf.mxu0
    %v1657 = vadd.f32 %v1482, %v1656
    %1658 = vmatmul.bf16.gmra.mxu0 %v1463
    %v1659 = vpop.f32.mrf.mxu0
    %v1660 = vadd.f32 %v1482, %v1659
    %v1661 = vpop.f32.mrf.mxu0
    %v1662 = vadd.f32 %v1482, %v1661
    %1663 = vmatmul.bf16.gmra.mxu0 %v1464
    %v1664 = vpop.f32.mrf.mxu0
    %v1665 = vadd.f32 %v1482, %v1664
    %v1666 = vpop.f32.mrf.mxu0
    %v1667 = vadd.f32 %v1482, %v1666
    %1668 = vdwg.mxu0
    %1669 = vmatpush.bf16.msra.mxu0 %v1563
    %1670 = vmatpush.bf16.msra.mxu0 %v1562
    %1671 = vmatpush.bf16.msra.mxu0 %v1561
    %1672 = vmatpush.bf16.msra.mxu0 %v1560
    %1673 = vmatpush.bf16.msra.mxu0 %v1559
    %1674 = vmatpush.bf16.msra.mxu0 %v1558
    %1675 = vmatpush.bf16.msra.mxu0 %v1557
    %1676 = vmatpush.bf16.msra.mxu0 %v1556
    %1677 = vmatmul.bf16.gmra.mxu0 %v1143
    %v1678 = vpop.f32.mrf.mxu0
    %v1679 = vadd.f32 %v1590, %v1678
    %v1680 = vpop.f32.mrf.mxu0
    %v1681 = vadd.f32 %v1592, %v1680
    %1682 = vmatmul.bf16.gmra.mxu0 %v1144
    %v1683 = vpop.f32.mrf.mxu0
    %v1684 = vadd.f32 %v1595, %v1683
    %v1685 = vpop.f32.mrf.mxu0
    %v1686 = vadd.f32 %v1597, %v1685
    %1687 = vmatmul.bf16.gmra.mxu0 %v1145
    %v1688 = vpop.f32.mrf.mxu0
    %v1689 = vadd.f32 %v1600, %v1688
    %v1690 = vpop.f32.mrf.mxu0
    %v1691 = vadd.f32 %v1602, %v1690
    %1692 = vmatmul.bf16.gmra.mxu0 %v1146
    %v1693 = vpop.f32.mrf.mxu0
    %v1694 = vadd.f32 %v1605, %v1693
    %v1695 = vpop.f32.mrf.mxu0
    %v1696 = vadd.f32 %v1607, %v1695
    %1697 = vmatmul.bf16.gmra.mxu0 %v1147
    %v1698 = vpop.f32.mrf.mxu0
    %v1699 = vadd.f32 %v1610, %v1698
    %v1700 = vpop.f32.mrf.mxu0
    %v1701 = vadd.f32 %v1612, %v1700
    %1702 = vmatmul.bf16.gmra.mxu0 %v1148
    %v1703 = vpop.f32.mrf.mxu0
    %v1704 = vadd.f32 %v1615, %v1703
    %v1705 = vpop.f32.mrf.mxu0
    %v1706 = vadd.f32 %v1617, %v1705
    %1707 = vmatmul.bf16.gmra.mxu0 %v1149
    %v1708 = vpop.f32.mrf.mxu0
    %v1709 = vadd.f32 %v1620, %v1708
    %v1710 = vpop.f32.mrf.mxu0
    %v1711 = vadd.f32 %v1622, %v1710
    %1712 = vmatmul.bf16.gmra.mxu0 %v1150
    %v1713 = vpop.f32.mrf.mxu0
    %v1714 = vadd.f32 %v1625, %v1713
    %v1715 = vpop.f32.mrf.mxu0
    %v1716 = vadd.f32 %v1627, %v1715
    %1717 = vmatmul.bf16.gmra.mxu0 %v1151
    %v1718 = vpop.f32.mrf.mxu0
    %v1719 = vadd.f32 %v1630, %v1718
    %v1720 = vpop.f32.mrf.mxu0
    %v1721 = vadd.f32 %v1632, %v1720
    %1722 = vmatmul.bf16.gmra.mxu0 %v1152
    %v1723 = vpop.f32.mrf.mxu0
    %v1724 = vadd.f32 %v1635, %v1723
    %v1725 = vpop.f32.mrf.mxu0
    %v1726 = vadd.f32 %v1637, %v1725
    %1727 = vmatmul.bf16.gmra.mxu0 %v1153
    %v1728 = vpop.f32.mrf.mxu0
    %v1729 = vadd.f32 %v1640, %v1728
    %v1730 = vpop.f32.mrf.mxu0
    %v1731 = vadd.f32 %v1642, %v1730
    %1732 = vmatmul.bf16.gmra.mxu0 %v1154
    %v1733 = vpop.f32.mrf.mxu0
    %v1734 = vadd.f32 %v1645, %v1733
    %v1735 = vpop.f32.mrf.mxu0
    %v1736 = vadd.f32 %v1647, %v1735
    %1737 = vmatmul.bf16.gmra.mxu0 %v1155
    %v1738 = vpop.f32.mrf.mxu0
    %v1739 = vadd.f32 %v1650, %v1738
    %v1740 = vpop.f32.mrf.mxu0
    %v1741 = vadd.f32 %v1652, %v1740
    %1742 = vmatmul.bf16.gmra.mxu0 %v1156
    %v1743 = vpop.f32.mrf.mxu0
    %v1744 = vadd.f32 %v1655, %v1743
    %v1745 = vpop.f32.mrf.mxu0
    %v1746 = vadd.f32 %v1657, %v1745
    %1747 = vmatmul.bf16.gmra.mxu0 %v1157
    %v1748 = vpop.f32.mrf.mxu0
    %v1749 = vadd.f32 %v1660, %v1748
    %v1750 = vpop.f32.mrf.mxu0
    %v1751 = vadd.f32 %v1662, %v1750
    %1752 = vmatmul.bf16.gmra.mxu0 %v1158
    %v1753 = vpop.f32.mrf.mxu0
    %v1754 = vadd.f32 %v1665, %v1753
    %v1755 = vpop.f32.mrf.mxu0
    %v1756 = vadd.f32 %v1667, %v1755
    %1757 = vdwg.mxu0
    %v1758 = vmax.f32 %v1679, 0.0
    %v1759 = vmax.f32 %v1681, 0.0
    %v1760 = vmax.f32 %v1684, 0.0
    %v1761 = vmax.f32 %v1686, 0.0
    %v1762 = vmax.f32 %v1689, 0.0
    %v1763 = vmax.f32 %v1691, 0.0
    %v1764 = vmax.f32 %v1694, 0.0
    %v1765 = vmax.f32 %v1696, 0.0
    %v1766 = vmax.f32 %v1699, 0.0
    %v1767 = vmax.f32 %v1701, 0.0
    %v1768 = vmax.f32 %v1704, 0.0
    %v1769 = vmax.f32 %v1706, 0.0
    %v1770 = vmax.f32 %v1709, 0.0
    %v1771 = vmax.f32 %v1711, 0.0
    %v1772 = vmax.f32 %v1714, 0.0
    %v1773 = vmax.f32 %v1716, 0.0
    %v1774 = vmax.f32 %v1719, 0.0
    %v1775 = vmax.f32 %v1721, 0.0
    %v1776 = vmax.f32 %v1724, 0.0
    %v1777 = vmax.f32 %v1726, 0.0
    %v1778 = vmax.f32 %v1729, 0.0
    %v1779 = vmax.f32 %v1731, 0.0
    %v1780 = vmax.f32 %v1734, 0.0
    %v1781 = vmax.f32 %v1736, 0.0
    %v1782 = vmax.f32 %v1739, 0.0
    %v1783 = vmax.f32 %v1741, 0.0
    %v1784 = vmax.f32 %v1744, 0.0
    %v1785 = vmax.f32 %v1746, 0.0
    %v1786 = vmax.f32 %v1749, 0.0
    %v1787 = vmax.f32 %v1751, 0.0
    %v1788 = vmax.f32 %v1754, 0.0
    %v1789 = vmax.f32 %v1756, 0.0
    %v1791 = vunpack.c.l.b16 %v77
    %v1792 = vunpack.c.h.b16 %v77
    %v1793 = vpack.c.b16 %v1791, %v1791
    %v1794 = vpack.c.b16 %v1792, %v1792
    %1797 = vmatpush.bf16.msra.mxu0 %v1150
    %1798 = vmatpush.bf16.msra.mxu0 %v1149
    %1799 = vmatpush.bf16.msra.mxu0 %v1148
    %1800 = vmatpush.bf16.msra.mxu0 %v1147
    %1801 = vmatpush.bf16.msra.mxu0 %v1146
    %1802 = vmatpush.bf16.msra.mxu0 %v1145
    %1803 = vmatpush.bf16.msra.mxu0 %v1144
    %1804 = vmatpush.bf16.msra.mxu0 %v1143
    %1805 = vmatmul.bf16.gmra.mxu0 %v1793
    %v1806 = vpop.f32.mrf.mxu0
    %v1807 = vadd.f32 0.0, %v1806
    %v1808 = vpop.f32.mrf.mxu0
    %1809 = vdwg.mxu0
    %1810 = vmatpush.bf16.msra.mxu0 %v1158
    %1811 = vmatpush.bf16.msra.mxu0 %v1157
    %1812 = vmatpush.bf16.msra.mxu0 %v1156
    %1813 = vmatpush.bf16.msra.mxu0 %v1155
    %1814 = vmatpush.bf16.msra.mxu0 %v1154
    %1815 = vmatpush.bf16.msra.mxu0 %v1153
    %1816 = vmatpush.bf16.msra.mxu0 %v1152
    %1817 = vmatpush.bf16.msra.mxu0 %v1151
    %1818 = vmatmul.bf16.gmra.mxu0 %v1794
    %v1819 = vpop.f32.mrf.mxu0
    %v1820 = vadd.f32 %v1807, %v1819
    %v1821 = vpop.f32.mrf.mxu0
    %1822 = vdwg.mxu0
    %v1823 = vpack.c.bf16 %v1758, %v1758
    %v1824 = vpack.c.bf16 %v1759, %v1759
    %v1825 = vpack.c.bf16 %v1760, %v1760
    %v1826 = vpack.c.bf16 %v1761, %v1761
    %v1827 = vpack.c.bf16 %v1762, %v1762
    %v1828 = vpack.c.bf16 %v1763, %v1763
    %v1829 = vpack.c.bf16 %v1764, %v1764
    %v1830 = vpack.c.bf16 %v1765, %v1765
    %v1831 = vpack.c.bf16 %v1766, %v1766
    %v1832 = vpack.c.bf16 %v1767, %v1767
    %v1833 = vpack.c.bf16 %v1768, %v1768
    %v1834 = vpack.c.bf16 %v1769, %v1769
    %v1835 = vpack.c.bf16 %v1770, %v1770
    %v1836 = vpack.c.bf16 %v1771, %v1771
    %v1837 = vpack.c.bf16 %v1772, %v1772
    %v1838 = vpack.c.bf16 %v1773, %v1773
    %v1839 = vpack.c.bf16 %v1774, %v1774
    %v1840 = vpack.c.bf16 %v1775, %v1775
    %v1841 = vpack.c.bf16 %v1776, %v1776
    %v1842 = vpack.c.bf16 %v1777, %v1777
    %v1843 = vpack.c.bf16 %v1778, %v1778
    %v1844 = vpack.c.bf16 %v1779, %v1779
    %v1845 = vpack.c.bf16 %v1780, %v1780
    %v1846 = vpack.c.bf16 %v1781, %v1781
    %v1847 = vpack.c.bf16 %v1782, %v1782
    %v1848 = vpack.c.bf16 %v1783, %v1783
    %v1849 = vpack.c.bf16 %v1784, %v1784
    %v1850 = vpack.c.bf16 %v1785, %v1785
    %v1851 = vpack.c.bf16 %v1786, %v1786
    %v1852 = vpack.c.bf16 %v1787, %v1787
    %v1853 = vpack.c.bf16 %v1788, %v1788
    %v1854 = vpack.c.bf16 %v1789, %v1789
    %v1855 = vld [vmem:[%s7] sm:$0xf]
    %v1856 = vld [vmem:[%s7 + $0x4] sm:$0xf]
    %v1857 = vld [vmem:[%s7 + $0x8] sm:$0xf]
    %v1858 = vld [vmem:[%s7 + $0xc] sm:$0xf]
    %v1859 = vld [vmem:[%s7 + $0x10] sm:$0xf]
    %v1860 = vld [vmem:[%s7 + $0x14] sm:$0xf]
    %v1861 = vld [vmem:[%s7 + $0x18] sm:$0xf]
    %v1862 = vld [vmem:[%s7 + $0x1c] sm:$0xf]
    %v1863 = vld [vmem:[%s7 + $0x20] sm:$0xf]
    %v1864 = vld [vmem:[%s7 + $0x24] sm:$0xf]
    %v1865 = vld [vmem:[%s7 + $0x28] sm:$0xf]
    %v1866 = vld [vmem:[%s7 + $0x2c] sm:$0xf]
    %v1867 = vld [vmem:[%s7 + $0x30] sm:$0xf]
    %v1868 = vld [vmem:[%s7 + $0x34] sm:$0xf]
    %v1869 = vld [vmem:[%s7 + $0x38] sm:$0xf]
    %v1870 = vld [vmem:[%s7 + $0x3c] sm:$0xf]
    %v1871 = vld [vmem:[%s7 + $0x40] sm:$0xf]
    %v1872 = vld [vmem:[%s7 + $0x44] sm:$0xf]
    %v1873 = vld [vmem:[%s7 + $0x48] sm:$0xf]
    %v1874 = vld [vmem:[%s7 + $0x4c] sm:$0xf]
    %v1875 = vld [vmem:[%s7 + $0x50] sm:$0xf]
    %v1876 = vld [vmem:[%s7 + $0x54] sm:$0xf]
    %v1877 = vld [vmem:[%s7 + $0x58] sm:$0xf]
    %v1878 = vld [vmem:[%s7 + $0x5c] sm:$0xf]
    %v1879 = vld [vmem:[%s7 + $0x60] sm:$0xf]
    %v1880 = vld [vmem:[%s7 + $0x64] sm:$0xf]
    %v1881 = vld [vmem:[%s7 + $0x68] sm:$0xf]
    %v1882 = vld [vmem:[%s7 + $0x6c] sm:$0xf]
    %v1883 = vld [vmem:[%s7 + $0x70] sm:$0xf]
    %v1884 = vld [vmem:[%s7 + $0x74] sm:$0xf]
    %v1885 = vld [vmem:[%s7 + $0x78] sm:$0xf]
    %v1886 = vld [vmem:[%s7 + $0x7c] sm:$0xf]
    %v1887 = vld [vmem:[%s8] sm:$0x1]
    %v1920 = vunpack.c.l.b16 %v1823
    %v1921 = vunpack.c.l.b16 %v1824
    %v1922 = vunpack.c.l.b16 %v1825
    %v1923 = vunpack.c.l.b16 %v1826
    %v1924 = vunpack.c.l.b16 %v1827
    %v1925 = vunpack.c.l.b16 %v1828
    %v1926 = vunpack.c.l.b16 %v1829
    %v1927 = vunpack.c.l.b16 %v1830
    %v1928 = vunpack.c.l.b16 %v1831
    %v1929 = vunpack.c.l.b16 %v1832
    %v1930 = vunpack.c.l.b16 %v1833
    %v1931 = vunpack.c.l.b16 %v1834
    %v1932 = vunpack.c.l.b16 %v1835
    %v1933 = vunpack.c.l.b16 %v1836
    %v1934 = vunpack.c.l.b16 %v1837
    %v1935 = vunpack.c.l.b16 %v1838
    %v1936 = vunpack.c.l.b16 %v1839
    %v1937 = vunpack.c.l.b16 %v1840
    %v1938 = vunpack.c.l.b16 %v1841
    %v1939 = vunpack.c.l.b16 %v1842
    %v1940 = vunpack.c.l.b16 %v1843
    %v1941 = vunpack.c.l.b16 %v1844
    %v1942 = vunpack.c.l.b16 %v1845
    %v1943 = vunpack.c.l.b16 %v1846
    %v1944 = vunpack.c.l.b16 %v1847
    %v1945 = vunpack.c.l.b16 %v1848
    %v1946 = vunpack.c.l.b16 %v1849
    %v1947 = vunpack.c.l.b16 %v1850
    %v1948 = vunpack.c.l.b16 %v1851
    %v1949 = vunpack.c.l.b16 %v1852
    %v1950 = vunpack.c.l.b16 %v1853
    %v1951 = vunpack.c.l.b16 %v1854
    %v1952 = vpack.c.b16 %v1921, %v1920
    %v1953 = vpack.c.b16 %v1923, %v1922
    %v1954 = vpack.c.b16 %v1925, %v1924
    %v1955 = vpack.c.b16 %v1927, %v1926
    %v1956 = vpack.c.b16 %v1929, %v1928
    %v1957 = vpack.c.b16 %v1931, %v1930
    %v1958 = vpack.c.b16 %v1933, %v1932
    %v1959 = vpack.c.b16 %v1935, %v1934
    %v1960 = vpack.c.b16 %v1937, %v1936
    %v1961 = vpack.c.b16 %v1939, %v1938
    %v1962 = vpack.c.b16 %v1941, %v1940
    %v1963 = vpack.c.b16 %v1943, %v1942
    %v1964 = vpack.c.b16 %v1945, %v1944
    %v1965 = vpack.c.b16 %v1947, %v1946
    %v1966 = vpack.c.b16 %v1949, %v1948
    %v1967 = vpack.c.b16 %v1951, %v1950
    %1984 = vmatpush.bf16.msra.mxu0 %v1959
    %1985 = vmatpush.bf16.msra.mxu0 %v1958
    %1986 = vmatpush.bf16.msra.mxu0 %v1957
    %1987 = vmatpush.bf16.msra.mxu0 %v1956
    %1988 = vmatpush.bf16.msra.mxu0 %v1955
    %1989 = vmatpush.bf16.msra.mxu0 %v1954
    %1990 = vmatpush.bf16.msra.mxu0 %v1953
    %1991 = vmatpush.bf16.msra.mxu0 %v1952
    %1992 = vmatmul.bf16.gmra.mxu0 %v239
    %v1993 = vpop.f32.mrf.mxu0
    %v1994 = vadd.f32 0.0, %v1993
    %v1995 = vpop.f32.mrf.mxu0
    %v1996 = vadd.f32 0.0, %v1995
    %1997 = vmatmul.bf16.gmra.mxu0 %v241
    %v1998 = vpop.f32.mrf.mxu0
    %v1999 = vadd.f32 0.0, %v1998
    %v2000 = vpop.f32.mrf.mxu0
    %v2001 = vadd.f32 0.0, %v2000
    %2002 = vmatmul.bf16.gmra.mxu0 %v243
    %v2003 = vpop.f32.mrf.mxu0
    %v2004 = vadd.f32 0.0, %v2003
    %v2005 = vpop.f32.mrf.mxu0
    %v2006 = vadd.f32 0.0, %v2005
    %2007 = vmatmul.bf16.gmra.mxu0 %v245
    %v2008 = vpop.f32.mrf.mxu0
    %v2009 = vadd.f32 0.0, %v2008
    %v2010 = vpop.f32.mrf.mxu0
    %v2011 = vadd.f32 0.0, %v2010
    %2012 = vmatmul.bf16.gmra.mxu0 %v247
    %v2013 = vpop.f32.mrf.mxu0
    %v2014 = vadd.f32 0.0, %v2013
    %v2015 = vpop.f32.mrf.mxu0
    %v2016 = vadd.f32 0.0, %v2015
    %2017 = vmatmul.bf16.gmra.mxu0 %v249
    %v2018 = vpop.f32.mrf.mxu0
    %v2019 = vadd.f32 0.0, %v2018
    %v2020 = vpop.f32.mrf.mxu0
    %v2021 = vadd.f32 0.0, %v2020
    %2022 = vmatmul.bf16.gmra.mxu0 %v251
    %v2023 = vpop.f32.mrf.mxu0
    %v2024 = vadd.f32 0.0, %v2023
    %v2025 = vpop.f32.mrf.mxu0
    %v2026 = vadd.f32 0.0, %v2025
    %2027 = vmatmul.bf16.gmra.mxu0 %v253
    %v2028 = vpop.f32.mrf.mxu0
    %v2029 = vadd.f32 0.0, %v2028
    %v2030 = vpop.f32.mrf.mxu0
    %v2031 = vadd.f32 0.0, %v2030
    %2032 = vmatmul.bf16.gmra.mxu0 %v255
    %v2033 = vpop.f32.mrf.mxu0
    %v2034 = vadd.f32 0.0, %v2033
    %v2035 = vpop.f32.mrf.mxu0
    %v2036 = vadd.f32 0.0, %v2035
    %2037 = vmatmul.bf16.gmra.mxu0 %v257
    %v2038 = vpop.f32.mrf.mxu0
    %v2039 = vadd.f32 0.0, %v2038
    %v2040 = vpop.f32.mrf.mxu0
    %v2041 = vadd.f32 0.0, %v2040
    %2042 = vmatmul.bf16.gmra.mxu0 %v259
    %v2043 = vpop.f32.mrf.mxu0
    %v2044 = vadd.f32 0.0, %v2043
    %v2045 = vpop.f32.mrf.mxu0
    %v2046 = vadd.f32 0.0, %v2045
    %2047 = vmatmul.bf16.gmra.mxu0 %v261
    %v2048 = vpop.f32.mrf.mxu0
    %v2049 = vadd.f32 0.0, %v2048
    %v2050 = vpop.f32.mrf.mxu0
    %v2051 = vadd.f32 0.0, %v2050
    %2052 = vmatmul.bf16.gmra.mxu0 %v263
    %v2053 = vpop.f32.mrf.mxu0
    %v2054 = vadd.f32 0.0, %v2053
    %v2055 = vpop.f32.mrf.mxu0
    %v2056 = vadd.f32 0.0, %v2055
    %2057 = vmatmul.bf16.gmra.mxu0 %v265
    %v2058 = vpop.f32.mrf.mxu0
    %v2059 = vadd.f32 0.0, %v2058
    %v2060 = vpop.f32.mrf.mxu0
    %v2061 = vadd.f32 0.0, %v2060
    %2062 = vmatmul.bf16.gmra.mxu0 %v267
    %v2063 = vpop.f32.mrf.mxu0
    %v2064 = vadd.f32 0.0, %v2063
    %v2065 = vpop.f32.mrf.mxu0
    %v2066 = vadd.f32 0.0, %v2065
    %2067 = vmatmul.bf16.gmra.mxu0 %v269
    %v2068 = vpop.f32.mrf.mxu0
    %v2069 = vadd.f32 0.0, %v2068
    %v2070 = vpop.f32.mrf.mxu0
    %v2071 = vadd.f32 0.0, %v2070
    %2072 = vdwg.mxu0
    %2073 = vmatpush.bf16.msra.mxu0 %v1967
    %2074 = vmatpush.bf16.msra.mxu0 %v1966
    %2075 = vmatpush.bf16.msra.mxu0 %v1965
    %2076 = vmatpush.bf16.msra.mxu0 %v1964
    %2077 = vmatpush.bf16.msra.mxu0 %v1963
    %2078 = vmatpush.bf16.msra.mxu0 %v1962
    %2079 = vmatpush.bf16.msra.mxu0 %v1961
    %2080 = vmatpush.bf16.msra.mxu0 %v1960
    %2081 = vmatmul.bf16.gmra.mxu0 %v240
    %v2082 = vpop.f32.mrf.mxu0
    %v2083 = vadd.f32 %v1994, %v2082
    %v2084 = vpop.f32.mrf.mxu0
    %v2085 = vadd.f32 %v1996, %v2084
    %2086 = vmatmul.bf16.gmra.mxu0 %v242
    %v2087 = vpop.f32.mrf.mxu0
    %v2088 = vadd.f32 %v1999, %v2087
    %v2089 = vpop.f32.mrf.mxu0
    %v2090 = vadd.f32 %v2001, %v2089
    %2091 = vmatmul.bf16.gmra.mxu0 %v244
    %v2092 = vpop.f32.mrf.mxu0
    %v2093 = vadd.f32 %v2004, %v2092
    %v2094 = vpop.f32.mrf.mxu0
    %v2095 = vadd.f32 %v2006, %v2094
    %2096 = vmatmul.bf16.gmra.mxu0 %v246
    %v2097 = vpop.f32.mrf.mxu0
    %v2098 = vadd.f32 %v2009, %v2097
    %v2099 = vpop.f32.mrf.mxu0
    %v2100 = vadd.f32 %v2011, %v2099
    %2101 = vmatmul.bf16.gmra.mxu0 %v248
    %v2102 = vpop.f32.mrf.mxu0
    %v2103 = vadd.f32 %v2014, %v2102
    %v2104 = vpop.f32.mrf.mxu0
    %v2105 = vadd.f32 %v2016, %v2104
    %2106 = vmatmul.bf16.gmra.mxu0 %v250
    %v2107 = vpop.f32.mrf.mxu0
    %v2108 = vadd.f32 %v2019, %v2107
    %v2109 = vpop.f32.mrf.mxu0
    %v2110 = vadd.f32 %v2021, %v2109
    %2111 = vmatmul.bf16.gmra.mxu0 %v252
    %v2112 = vpop.f32.mrf.mxu0
    %v2113 = vadd.f32 %v2024, %v2112
    %v2114 = vpop.f32.mrf.mxu0
    %v2115 = vadd.f32 %v2026, %v2114
    %2116 = vmatmul.bf16.gmra.mxu0 %v254
    %v2117 = vpop.f32.mrf.mxu0
    %v2118 = vadd.f32 %v2029, %v2117
    %v2119 = vpop.f32.mrf.mxu0
    %v2120 = vadd.f32 %v2031, %v2119
    %2121 = vmatmul.bf16.gmra.mxu0 %v256
    %v2122 = vpop.f32.mrf.mxu0
    %v2123 = vadd.f32 %v2034, %v2122
    %v2124 = vpop.f32.mrf.mxu0
    %v2125 = vadd.f32 %v2036, %v2124
    %2126 = vmatmul.bf16.gmra.mxu0 %v258
    %v2127 = vpop.f32.mrf.mxu0
    %v2128 = vadd.f32 %v2039, %v2127
    %v2129 = vpop.f32.mrf.mxu0
    %v2130 = vadd.f32 %v2041, %v2129
    %2131 = vmatmul.bf16.gmra.mxu0 %v260
    %v2132 = vpop.f32.mrf.mxu0
    %v2133 = vadd.f32 %v2044, %v2132
    %v2134 = vpop.f32.mrf.mxu0
    %v2135 = vadd.f32 %v2046, %v2134
    %2136 = vmatmul.bf16.gmra.mxu0 %v262
    %v2137 = vpop.f32.mrf.mxu0
    %v2138 = vadd.f32 %v2049, %v2137
    %v2139 = vpop.f32.mrf.mxu0
    %v2140 = vadd.f32 %v2051, %v2139
    %2141 = vmatmul.bf16.gmra.mxu0 %v264
    %v2142 = vpop.f32.mrf.mxu0
    %v2143 = vadd.f32 %v2054, %v2142
    %v2144 = vpop.f32.mrf.mxu0
    %v2145 = vadd.f32 %v2056, %v2144
    %2146 = vmatmul.bf16.gmra.mxu0 %v266
    %v2147 = vpop.f32.mrf.mxu0
    %v2148 = vadd.f32 %v2059, %v2147
    %v2149 = vpop.f32.mrf.mxu0
    %v2150 = vadd.f32 %v2061, %v2149
    %2151 = vmatmul.bf16.gmra.mxu0 %v268
    %v2152 = vpop.f32.mrf.mxu0
    %v2153 = vadd.f32 %v2064, %v2152
    %v2154 = vpop.f32.mrf.mxu0
    %v2155 = vadd.f32 %v2066, %v2154
    %2156 = vmatmul.bf16.gmra.mxu0 %v270
    %v2157 = vpop.f32.mrf.mxu0
    %v2158 = vadd.f32 %v2069, %v2157
    %v2159 = vpop.f32.mrf.mxu0
    %v2160 = vadd.f32 %v2071, %v2159
    %2161 = vdwg.mxu0
    %v2162 = vpack.c.bf16 %v2083, %v2083
    %v2163 = vpack.c.bf16 %v2085, %v2085
    %v2164 = vpack.c.bf16 %v2088, %v2088
    %v2165 = vpack.c.bf16 %v2090, %v2090
    %v2166 = vpack.c.bf16 %v2093, %v2093
    %v2167 = vpack.c.bf16 %v2095, %v2095
    %v2168 = vpack.c.bf16 %v2098, %v2098
    %v2169 = vpack.c.bf16 %v2100, %v2100
    %v2170 = vpack.c.bf16 %v2103, %v2103
    %v2171 = vpack.c.bf16 %v2105, %v2105
    %v2172 = vpack.c.bf16 %v2108, %v2108
    %v2173 = vpack.c.bf16 %v2110, %v2110
    %v2174 = vpack.c.bf16 %v2113, %v2113
    %v2175 = vpack.c.bf16 %v2115, %v2115
    %v2176 = vpack.c.bf16 %v2118, %v2118
    %v2177 = vpack.c.bf16 %v2120, %v2120
    %v2178 = vpack.c.bf16 %v2123, %v2123
    %v2179 = vpack.c.bf16 %v2125, %v2125
    %v2180 = vpack.c.bf16 %v2128, %v2128
    %v2181 = vpack.c.bf16 %v2130, %v2130
    %v2182 = vpack.c.bf16 %v2133, %v2133
    %v2183 = vpack.c.bf16 %v2135, %v2135
    %v2184 = vpack.c.bf16 %v2138, %v2138
    %v2185 = vpack.c.bf16 %v2140, %v2140
    %v2186 = vpack.c.bf16 %v2143, %v2143
    %v2187 = vpack.c.bf16 %v2145, %v2145
    %v2188 = vpack.c.bf16 %v2148, %v2148
    %v2189 = vpack.c.bf16 %v2150, %v2150
    %v2190 = vpack.c.bf16 %v2153, %v2153
    %v2191 = vpack.c.bf16 %v2155, %v2155
    %v2192 = vpack.c.bf16 %v2158, %v2158
    %v2193 = vpack.c.bf16 %v2160, %v2160
    %v2226 = vunpack.c.l.b16 %v2162
    %v2227 = vunpack.c.l.b16 %v2163
    %v2228 = vunpack.c.l.b16 %v2164
    %v2229 = vunpack.c.l.b16 %v2165
    %v2230 = vunpack.c.l.b16 %v2166
    %v2231 = vunpack.c.l.b16 %v2167
    %v2232 = vunpack.c.l.b16 %v2168
    %v2233 = vunpack.c.l.b16 %v2169
    %v2234 = vunpack.c.l.b16 %v2170
    %v2235 = vunpack.c.l.b16 %v2171
    %v2236 = vunpack.c.l.b16 %v2172
    %v2237 = vunpack.c.l.b16 %v2173
    %v2238 = vunpack.c.l.b16 %v2174
    %v2239 = vunpack.c.l.b16 %v2175
    %v2240 = vunpack.c.l.b16 %v2176
    %v2241 = vunpack.c.l.b16 %v2177
    %v2242 = vunpack.c.l.b16 %v2178
    %v2243 = vunpack.c.l.b16 %v2179
    %v2244 = vunpack.c.l.b16 %v2180
    %v2245 = vunpack.c.l.b16 %v2181
    %v2246 = vunpack.c.l.b16 %v2182
    %v2247 = vunpack.c.l.b16 %v2183
    %v2248 = vunpack.c.l.b16 %v2184
    %v2249 = vunpack.c.l.b16 %v2185
    %v2250 = vunpack.c.l.b16 %v2186
    %v2251 = vunpack.c.l.b16 %v2187
    %v2252 = vunpack.c.l.b16 %v2188
    %v2253 = vunpack.c.l.b16 %v2189
    %v2254 = vunpack.c.l.b16 %v2190
    %v2255 = vunpack.c.l.b16 %v2191
    %v2256 = vunpack.c.l.b16 %v2192
    %v2257 = vunpack.c.l.b16 %v2193
    %v2258 = vpack.c.b16 %v2227, %v2226
    %v2259 = vpack.c.b16 %v2229, %v2228
    %v2260 = vpack.c.b16 %v2231, %v2230
    %v2261 = vpack.c.b16 %v2233, %v2232
    %v2262 = vpack.c.b16 %v2235, %v2234
    %v2263 = vpack.c.b16 %v2237, %v2236
    %v2264 = vpack.c.b16 %v2239, %v2238
    %v2265 = vpack.c.b16 %v2241, %v2240
    %v2266 = vpack.c.b16 %v2243, %v2242
    %v2267 = vpack.c.b16 %v2245, %v2244
    %v2268 = vpack.c.b16 %v2247, %v2246
    %v2269 = vpack.c.b16 %v2249, %v2248
    %v2270 = vpack.c.b16 %v2251, %v2250
    %v2271 = vpack.c.b16 %v2253, %v2252
    %v2272 = vpack.c.b16 %v2255, %v2254
    %v2273 = vpack.c.b16 %v2257, %v2256
    %v2291 = vperm.slane %v1887, 0
    %v2325 = vunpack.c.l.b16 %v1855
    %v2326 = vunpack.c.l.b16 %v1856
    %v2327 = vunpack.c.l.b16 %v1857
    %v2328 = vunpack.c.l.b16 %v1858
    %v2329 = vunpack.c.l.b16 %v1859
    %v2330 = vunpack.c.l.b16 %v1860
    %v2331 = vunpack.c.l.b16 %v1861
    %v2332 = vunpack.c.l.b16 %v1862
    %v2333 = vunpack.c.l.b16 %v1863
    %v2334 = vunpack.c.l.b16 %v1864
    %v2335 = vunpack.c.l.b16 %v1865
    %v2336 = vunpack.c.l.b16 %v1866
    %v2337 = vunpack.c.l.b16 %v1867
    %v2338 = vunpack.c.l.b16 %v1868
    %v2339 = vunpack.c.l.b16 %v1869
    %v2340 = vunpack.c.l.b16 %v1870
    %v2341 = vunpack.c.l.b16 %v1871
    %v2342 = vunpack.c.l.b16 %v1872
    %v2343 = vunpack.c.l.b16 %v1873
    %v2344 = vunpack.c.l.b16 %v1874
    %v2345 = vunpack.c.l.b16 %v1875
    %v2346 = vunpack.c.l.b16 %v1876
    %v2347 = vunpack.c.l.b16 %v1877
    %v2348 = vunpack.c.l.b16 %v1878
    %v2349 = vunpack.c.l.b16 %v1879
    %v2350 = vunpack.c.l.b16 %v1880
    %v2351 = vunpack.c.l.b16 %v1881
    %v2352 = vunpack.c.l.b16 %v1882
    %v2353 = vunpack.c.l.b16 %v1883
    %v2354 = vunpack.c.l.b16 %v1884
    %v2355 = vunpack.c.l.b16 %v1885
    %v2356 = vunpack.c.l.b16 %v1886
    %v2357 = vpack.c.b16 %v2326, %v2325
    %v2358 = vpack.c.b16 %v2328, %v2327
    %v2359 = vpack.c.b16 %v2330, %v2329
    %v2360 = vpack.c.b16 %v2332, %v2331
    %v2361 = vpack.c.b16 %v2334, %v2333
    %v2362 = vpack.c.b16 %v2336, %v2335
    %v2363 = vpack.c.b16 %v2338, %v2337
    %v2364 = vpack.c.b16 %v2340, %v2339
    %v2365 = vpack.c.b16 %v2342, %v2341
    %v2366 = vpack.c.b16 %v2344, %v2343
    %v2367 = vpack.c.b16 %v2346, %v2345
    %v2368 = vpack.c.b16 %v2348, %v2347
    %v2369 = vpack.c.b16 %v2350, %v2349
    %v2370 = vpack.c.b16 %v2352, %v2351
    %v2371 = vpack.c.b16 %v2354, %v2353
    %v2372 = vpack.c.b16 %v2356, %v2355
    %2389 = vmatpush.bf16.msra.mxu0 %v2364
    %2390 = vmatpush.bf16.msra.mxu0 %v2363
    %2391 = vmatpush.bf16.msra.mxu0 %v2362
    %2392 = vmatpush.bf16.msra.mxu0 %v2361
    %2393 = vmatpush.bf16.msra.mxu0 %v2360
    %2394 = vmatpush.bf16.msra.mxu0 %v2359
    %2395 = vmatpush.bf16.msra.mxu0 %v2358
    %2396 = vmatpush.bf16.msra.mxu0 %v2357
    %2397 = vmatmul.bf16.gmra.mxu0 %v2258
    %v2398 = vpop.f32.mrf.mxu0
    %v2399 = vadd.f32 %v2291, %v2398
    %v2400 = vpop.f32.mrf.mxu0
    %v2401 = vadd.f32 %v2291, %v2400
    %2402 = vmatmul.bf16.gmra.mxu0 %v2259
    %v2403 = vpop.f32.mrf.mxu0
    %v2404 = vadd.f32 %v2291, %v2403
    %v2405 = vpop.f32.mrf.mxu0
    %v2406 = vadd.f32 %v2291, %v2405
    %2407 = vmatmul.bf16.gmra.mxu0 %v2260
    %v2408 = vpop.f32.mrf.mxu0
    %v2409 = vadd.f32 %v2291, %v2408
    %v2410 = vpop.f32.mrf.mxu0
    %v2411 = vadd.f32 %v2291, %v2410
    %2412 = vmatmul.bf16.gmra.mxu0 %v2261
    %v2413 = vpop.f32.mrf.mxu0
    %v2414 = vadd.f32 %v2291, %v2413
    %v2415 = vpop.f32.mrf.mxu0
    %v2416 = vadd.f32 %v2291, %v2415
    %2417 = vmatmul.bf16.gmra.mxu0 %v2262
    %v2418 = vpop.f32.mrf.mxu0
    %v2419 = vadd.f32 %v2291, %v2418
    %v2420 = vpop.f32.mrf.mxu0
    %v2421 = vadd.f32 %v2291, %v2420
    %2422 = vmatmul.bf16.gmra.mxu0 %v2263
    %v2423 = vpop.f32.mrf.mxu0
    %v2424 = vadd.f32 %v2291, %v2423
    %v2425 = vpop.f32.mrf.mxu0
    %v2426 = vadd.f32 %v2291, %v2425
    %2427 = vmatmul.bf16.gmra.mxu0 %v2264
    %v2428 = vpop.f32.mrf.mxu0
    %v2429 = vadd.f32 %v2291, %v2428
    %v2430 = vpop.f32.mrf.mxu0
    %v2431 = vadd.f32 %v2291, %v2430
    %2432 = vmatmul.bf16.gmra.mxu0 %v2265
    %v2433 = vpop.f32.mrf.mxu0
    %v2434 = vadd.f32 %v2291, %v2433
    %v2435 = vpop.f32.mrf.mxu0
    %v2436 = vadd.f32 %v2291, %v2435
    %2437 = vmatmul.bf16.gmra.mxu0 %v2266
    %v2438 = vpop.f32.mrf.mxu0
    %v2439 = vadd.f32 %v2291, %v2438
    %v2440 = vpop.f32.mrf.mxu0
    %v2441 = vadd.f32 %v2291, %v2440
    %2442 = vmatmul.bf16.gmra.mxu0 %v2267
    %v2443 = vpop.f32.mrf.mxu0
    %v2444 = vadd.f32 %v2291, %v2443
    %v2445 = vpop.f32.mrf.mxu0
    %v2446 = vadd.f32 %v2291, %v2445
    %2447 = vmatmul.bf16.gmra.mxu0 %v2268
    %v2448 = vpop.f32.mrf.mxu0
    %v2449 = vadd.f32 %v2291, %v2448
    %v2450 = vpop.f32.mrf.mxu0
    %v2451 = vadd.f32 %v2291, %v2450
    %2452 = vmatmul.bf16.gmra.mxu0 %v2269
    %v2453 = vpop.f32.mrf.mxu0
    %v2454 = vadd.f32 %v2291, %v2453
    %v2455 = vpop.f32.mrf.mxu0
    %v2456 = vadd.f32 %v2291, %v2455
    %2457 = vmatmul.bf16.gmra.mxu0 %v2270
    %v2458 = vpop.f32.mrf.mxu0
    %v2459 = vadd.f32 %v2291, %v2458
    %v2460 = vpop.f32.mrf.mxu0
    %v2461 = vadd.f32 %v2291, %v2460
    %2462 = vmatmul.bf16.gmra.mxu0 %v2271
    %v2463 = vpop.f32.mrf.mxu0
    %v2464 = vadd.f32 %v2291, %v2463
    %v2465 = vpop.f32.mrf.mxu0
    %v2466 = vadd.f32 %v2291, %v2465
    %2467 = vmatmul.bf16.gmra.mxu0 %v2272
    %v2468 = vpop.f32.mrf.mxu0
    %v2469 = vadd.f32 %v2291, %v2468
    %v2470 = vpop.f32.mrf.mxu0
    %v2471 = vadd.f32 %v2291, %v2470
    %2472 = vmatmul.bf16.gmra.mxu0 %v2273
    %v2473 = vpop.f32.mrf.mxu0
    %v2474 = vadd.f32 %v2291, %v2473
    %v2475 = vpop.f32.mrf.mxu0
    %v2476 = vadd.f32 %v2291, %v2475
    %2477 = vdwg.mxu0
    %2478 = vmatpush.bf16.msra.mxu0 %v2372
    %2479 = vmatpush.bf16.msra.mxu0 %v2371
    %2480 = vmatpush.bf16.msra.mxu0 %v2370
    %2481 = vmatpush.bf16.msra.mxu0 %v2369
    %2482 = vmatpush.bf16.msra.mxu0 %v2368
    %2483 = vmatpush.bf16.msra.mxu0 %v2367
    %2484 = vmatpush.bf16.msra.mxu0 %v2366
    %2485 = vmatpush.bf16.msra.mxu0 %v2365
    %2486 = vmatmul.bf16.gmra.mxu0 %v1952
    %v2487 = vpop.f32.mrf.mxu0
    %v2488 = vadd.f32 %v2399, %v2487
    %v2489 = vpop.f32.mrf.mxu0
    %v2490 = vadd.f32 %v2401, %v2489
    %2491 = vmatmul.bf16.gmra.mxu0 %v1953
    %v2492 = vpop.f32.mrf.mxu0
    %v2493 = vadd.f32 %v2404, %v2492
    %v2494 = vpop.f32.mrf.mxu0
    %v2495 = vadd.f32 %v2406, %v2494
    %2496 = vmatmul.bf16.gmra.mxu0 %v1954
    %v2497 = vpop.f32.mrf.mxu0
    %v2498 = vadd.f32 %v2409, %v2497
    %v2499 = vpop.f32.mrf.mxu0
    %v2500 = vadd.f32 %v2411, %v2499
    %2501 = vmatmul.bf16.gmra.mxu0 %v1955
    %v2502 = vpop.f32.mrf.mxu0
    %v2503 = vadd.f32 %v2414, %v2502
    %v2504 = vpop.f32.mrf.mxu0
    %v2505 = vadd.f32 %v2416, %v2504
    %2506 = vmatmul.bf16.gmra.mxu0 %v1956
    %v2507 = vpop.f32.mrf.mxu0
    %v2508 = vadd.f32 %v2419, %v2507
    %v2509 = vpop.f32.mrf.mxu0
    %v2510 = vadd.f32 %v2421, %v2509
    %2511 = vmatmul.bf16.gmra.mxu0 %v1957
    %v2512 = vpop.f32.mrf.mxu0
    %v2513 = vadd.f32 %v2424, %v2512
    %v2514 = vpop.f32.mrf.mxu0
    %v2515 = vadd.f32 %v2426, %v2514
    %2516 = vmatmul.bf16.gmra.mxu0 %v1958
    %v2517 = vpop.f32.mrf.mxu0
    %v2518 = vadd.f32 %v2429, %v2517
    %v2519 = vpop.f32.mrf.mxu0
    %v2520 = vadd.f32 %v2431, %v2519
    %2521 = vmatmul.bf16.gmra.mxu0 %v1959
    %v2522 = vpop.f32.mrf.mxu0
    %v2523 = vadd.f32 %v2434, %v2522
    %v2524 = vpop.f32.mrf.mxu0
    %v2525 = vadd.f32 %v2436, %v2524
    %2526 = vmatmul.bf16.gmra.mxu0 %v1960
    %v2527 = vpop.f32.mrf.mxu0
    %v2528 = vadd.f32 %v2439, %v2527
    %v2529 = vpop.f32.mrf.mxu0
    %v2530 = vadd.f32 %v2441, %v2529
    %2531 = vmatmul.bf16.gmra.mxu0 %v1961
    %v2532 = vpop.f32.mrf.mxu0
    %v2533 = vadd.f32 %v2444, %v2532
    %v2534 = vpop.f32.mrf.mxu0
    %v2535 = vadd.f32 %v2446, %v2534
    %2536 = vmatmul.bf16.gmra.mxu0 %v1962
    %v2537 = vpop.f32.mrf.mxu0
    %v2538 = vadd.f32 %v2449, %v2537
    %v2539 = vpop.f32.mrf.mxu0
    %v2540 = vadd.f32 %v2451, %v2539
    %2541 = vmatmul.bf16.gmra.mxu0 %v1963
    %v2542 = vpop.f32.mrf.mxu0
    %v2543 = vadd.f32 %v2454, %v2542
    %v2544 = vpop.f32.mrf.mxu0
    %v2545 = vadd.f32 %v2456, %v2544
    %2546 = vmatmul.bf16.gmra.mxu0 %v1964
    %v2547 = vpop.f32.mrf.mxu0
    %v2548 = vadd.f32 %v2459, %v2547
    %v2549 = vpop.f32.mrf.mxu0
    %v2550 = vadd.f32 %v2461, %v2549
    %2551 = vmatmul.bf16.gmra.mxu0 %v1965
    %v2552 = vpop.f32.mrf.mxu0
    %v2553 = vadd.f32 %v2464, %v2552
    %v2554 = vpop.f32.mrf.mxu0
    %v2555 = vadd.f32 %v2466, %v2554
    %2556 = vmatmul.bf16.gmra.mxu0 %v1966
    %v2557 = vpop.f32.mrf.mxu0
    %v2558 = vadd.f32 %v2469, %v2557
    %v2559 = vpop.f32.mrf.mxu0
    %v2560 = vadd.f32 %v2471, %v2559
    %2561 = vmatmul.bf16.gmra.mxu0 %v1967
    %v2562 = vpop.f32.mrf.mxu0
    %v2563 = vadd.f32 %v2474, %v2562
    %v2564 = vpop.f32.mrf.mxu0
    %v2565 = vadd.f32 %v2476, %v2564
    %2566 = vdwg.mxu0
    %v2567 = vmax.f32 %v2488, 0.0
    %v2568 = vmax.f32 %v2490, 0.0
    %v2569 = vmax.f32 %v2493, 0.0
    %v2570 = vmax.f32 %v2495, 0.0
    %v2571 = vmax.f32 %v2498, 0.0
    %v2572 = vmax.f32 %v2500, 0.0
    %v2573 = vmax.f32 %v2503, 0.0
    %v2574 = vmax.f32 %v2505, 0.0
    %v2575 = vmax.f32 %v2508, 0.0
    %v2576 = vmax.f32 %v2510, 0.0
    %v2577 = vmax.f32 %v2513, 0.0
    %v2578 = vmax.f32 %v2515, 0.0
    %v2579 = vmax.f32 %v2518, 0.0
    %v2580 = vmax.f32 %v2520, 0.0
    %v2581 = vmax.f32 %v2523, 0.0
    %v2582 = vmax.f32 %v2525, 0.0
    %v2583 = vmax.f32 %v2528, 0.0
    %v2584 = vmax.f32 %v2530, 0.0
    %v2585 = vmax.f32 %v2533, 0.0
    %v2586 = vmax.f32 %v2535, 0.0
    %v2587 = vmax.f32 %v2538, 0.0
    %v2588 = vmax.f32 %v2540, 0.0
    %v2589 = vmax.f32 %v2543, 0.0
    %v2590 = vmax.f32 %v2545, 0.0
    %v2591 = vmax.f32 %v2548, 0.0
    %v2592 = vmax.f32 %v2550, 0.0
    %v2593 = vmax.f32 %v2553, 0.0
    %v2594 = vmax.f32 %v2555, 0.0
    %v2595 = vmax.f32 %v2558, 0.0
    %v2596 = vmax.f32 %v2560, 0.0
    %v2597 = vmax.f32 %v2563, 0.0
    %v2598 = vmax.f32 %v2565, 0.0
    %2599 = vmatpush.bf16.msra.mxu0 %v1959
    %2600 = vmatpush.bf16.msra.mxu0 %v1958
    %2601 = vmatpush.bf16.msra.mxu0 %v1957
    %2602 = vmatpush.bf16.msra.mxu0 %v1956
    %2603 = vmatpush.bf16.msra.mxu0 %v1955
    %2604 = vmatpush.bf16.msra.mxu0 %v1954
    %2605 = vmatpush.bf16.msra.mxu0 %v1953
    %2606 = vmatpush.bf16.msra.mxu0 %v1952
    %2607 = vmatmul.bf16.gmra.mxu0 %v1793
    %v2608 = vpop.f32.mrf.mxu0
    %v2609 = vadd.f32 0.0, %v2608
    %v2610 = vpop.f32.mrf.mxu0
    %2611 = vdwg.mxu0
    %2612 = vmatpush.bf16.msra.mxu0 %v1967
    %2613 = vmatpush.bf16.msra.mxu0 %v1966
    %2614 = vmatpush.bf16.msra.mxu0 %v1965
    %2615 = vmatpush.bf16.msra.mxu0 %v1964
    %2616 = vmatpush.bf16.msra.mxu0 %v1963
    %2617 = vmatpush.bf16.msra.mxu0 %v1962
    %2618 = vmatpush.bf16.msra.mxu0 %v1961
    %2619 = vmatpush.bf16.msra.mxu0 %v1960
    %2620 = vmatmul.bf16.gmra.mxu0 %v1794
    %v2621 = vpop.f32.mrf.mxu0
    %v2622 = vadd.f32 %v2609, %v2621
    %v2623 = vpop.f32.mrf.mxu0
    %2624 = vdwg.mxu0
    %v2625 = vpack.c.bf16 %v2568, %v2567
    %v2626 = vpack.c.bf16 %v2570, %v2569
    %v2627 = vpack.c.bf16 %v2572, %v2571
    %v2628 = vpack.c.bf16 %v2574, %v2573
    %v2629 = vpack.c.bf16 %v2576, %v2575
    %v2630 = vpack.c.bf16 %v2578, %v2577
    %v2631 = vpack.c.bf16 %v2580, %v2579
    %v2632 = vpack.c.bf16 %v2582, %v2581
    %v2633 = vpack.c.bf16 %v2584, %v2583
    %v2634 = vpack.c.bf16 %v2586, %v2585
    %v2635 = vpack.c.bf16 %v2588, %v2587
    %v2636 = vpack.c.bf16 %v2590, %v2589
    %v2637 = vpack.c.bf16 %v2592, %v2591
    %v2638 = vpack.c.bf16 %v2594, %v2593
    %v2639 = vpack.c.bf16 %v2596, %v2595
    %v2640 = vpack.c.bf16 %v2598, %v2597
    %2641 = vmatpush.bf16.msra.mxu0 %v2632
    %2642 = vmatpush.bf16.msra.mxu0 %v2631
    %2643 = vmatpush.bf16.msra.mxu0 %v2630
    %2644 = vmatpush.bf16.msra.mxu0 %v2629
    %2645 = vmatpush.bf16.msra.mxu0 %v2628
    %2646 = vmatpush.bf16.msra.mxu0 %v2627
    %2647 = vmatpush.bf16.msra.mxu0 %v2626
    %2648 = vmatpush.bf16.msra.mxu0 %v2625
    %2649 = vmatmul.bf16.gmra.mxu0 %v1793
    %v2650 = vpop.f32.mrf.mxu0
    %v2651 = vadd.f32 0.0, %v2650
    %v2652 = vpop.f32.mrf.mxu0
    %2653 = vdwg.mxu0
    %2654 = vmatpush.bf16.msra.mxu0 %v2640
    %2655 = vmatpush.bf16.msra.mxu0 %v2639
    %2656 = vmatpush.bf16.msra.mxu0 %v2638
    %2657 = vmatpush.bf16.msra.mxu0 %v2637
    %2658 = vmatpush.bf16.msra.mxu0 %v2636
    %2659 = vmatpush.bf16.msra.mxu0 %v2635
    %2660 = vmatpush.bf16.msra.mxu0 %v2634
    %2661 = vmatpush.bf16.msra.mxu0 %v2633
    %2662 = vmatmul.bf16.gmra.mxu0 %v1794
    %v2663 = vpop.f32.mrf.mxu0
    %v2664 = vadd.f32 %v2651, %v2663
    %v2665 = vpop.f32.mrf.mxu0
    %2666 = vdwg.mxu0
    %v2667 = vpack.c.bf16 %v1820, %v1820
    %v2668 = vpack.c.bf16 %v2622, %v2622
    %v2669 = vpack.c.bf16 %v2664, %v2664
    %v2670 = vld [vmem:[%s9] sm:$0xf]
    %v2671 = vld [vmem:[%s9 + $0x4] sm:$0xf]
    %v2672 = vld [vmem:[%s9 + $0x8] sm:$0xf]
    %v2673 = vld [vmem:[%s9 + $0xc] sm:$0xf]
    %v2674 = vld [vmem:[%s9 + $0x10] sm:$0xf]
    %v2675 = vld [vmem:[%s9 + $0x14] sm:$0xf]
    %v2676 = vld [vmem:[%s9 + $0x18] sm:$0xf]
    %v2677 = vld [vmem:[%s9 + $0x1c] sm:$0xf]
    %v2678 = vld [vmem:[%s9 + $0x20] sm:$0xf]
    %v2679 = vld [vmem:[%s9 + $0x24] sm:$0xf]
    %v2680 = vld [vmem:[%s9 + $0x28] sm:$0xf]
    %v2681 = vld [vmem:[%s9 + $0x2c] sm:$0xf]
    %v2682 = vld [vmem:[%s9 + $0x30] sm:$0xf]
    %v2683 = vld [vmem:[%s9 + $0x34] sm:$0xf]
    %v2684 = vld [vmem:[%s9 + $0x38] sm:$0xf]
    %v2685 = vld [vmem:[%s9 + $0x3c] sm:$0xf]
    %v2686 = vld [vmem:[%s9 + $0x40] sm:$0xf]
    %v2687 = vld [vmem:[%s9 + $0x44] sm:$0xf]
    %v2688 = vld [vmem:[%s9 + $0x48] sm:$0xf]
    %v2689 = vld [vmem:[%s9 + $0x4c] sm:$0xf]
    %v2690 = vld [vmem:[%s9 + $0x50] sm:$0xf]
    %v2691 = vld [vmem:[%s9 + $0x54] sm:$0xf]
    %v2692 = vld [vmem:[%s9 + $0x58] sm:$0xf]
    %v2693 = vld [vmem:[%s9 + $0x5c] sm:$0xf]
    %v2694 = vld [vmem:[%s9 + $0x60] sm:$0xf]
    %v2695 = vld [vmem:[%s9 + $0x64] sm:$0xf]
    %v2696 = vld [vmem:[%s9 + $0x68] sm:$0xf]
    %v2697 = vld [vmem:[%s9 + $0x6c] sm:$0xf]
    %v2698 = vld [vmem:[%s9 + $0x70] sm:$0xf]
    %v2699 = vld [vmem:[%s9 + $0x74] sm:$0xf]
    %v2700 = vld [vmem:[%s9 + $0x78] sm:$0xf]
    %v2701 = vld [vmem:[%s9 + $0x7c] sm:$0xf]
    %v2702 = vld [vmem:[%s9 + $0x80] sm:$0xf]
    %v2703 = vld [vmem:[%s9 + $0x84] sm:$0xf]
    %v2704 = vld [vmem:[%s9 + $0x88] sm:$0xf]
    %v2705 = vld [vmem:[%s9 + $0x8c] sm:$0xf]
    %v2706 = vld [vmem:[%s9 + $0x90] sm:$0xf]
    %v2707 = vld [vmem:[%s9 + $0x94] sm:$0xf]
    %v2708 = vld [vmem:[%s9 + $0x98] sm:$0xf]
    %v2709 = vld [vmem:[%s9 + $0x9c] sm:$0xf]
    %v2710 = vld [vmem:[%s9 + $0xa0] sm:$0xf]
    %v2711 = vld [vmem:[%s9 + $0xa4] sm:$0xf]
    %v2712 = vld [vmem:[%s9 + $0xa8] sm:$0xf]
    %v2713 = vld [vmem:[%s9 + $0xac] sm:$0xf]
    %v2714 = vld [vmem:[%s9 + $0xb0] sm:$0xf]
    %v2715 = vld [vmem:[%s9 + $0xb4] sm:$0xf]
    %v2716 = vld [vmem:[%s9 + $0xb8] sm:$0xf]
    %v2717 = vld [vmem:[%s9 + $0xbc] sm:$0xf]
    %v2718 = vld [vmem:[%s10] sm:$0x1]
    %v2720 = vperm.slane %v2718, 0
    %v2770 = vunpack.c.l.b16 %v2670
    %v2771 = vunpack.c.l.b16 %v2671
    %v2772 = vunpack.c.l.b16 %v2672
    %v2773 = vunpack.c.l.b16 %v2673
    %v2774 = vunpack.c.l.b16 %v2674
    %v2775 = vunpack.c.l.b16 %v2675
    %v2776 = vunpack.c.l.b16 %v2676
    %v2777 = vunpack.c.l.b16 %v2677
    %v2778 = vunpack.c.l.b16 %v2678
    %v2779 = vunpack.c.l.b16 %v2679
    %v2780 = vunpack.c.l.b16 %v2680
    %v2781 = vunpack.c.l.b16 %v2681
    %v2782 = vunpack.c.l.b16 %v2682
    %v2783 = vunpack.c.l.b16 %v2683
    %v2784 = vunpack.c.l.b16 %v2684
    %v2785 = vunpack.c.l.b16 %v2685
    %v2786 = vunpack.c.l.b16 %v2686
    %v2787 = vunpack.c.l.b16 %v2687
    %v2788 = vunpack.c.l.b16 %v2688
    %v2789 = vunpack.c.l.b16 %v2689
    %v2790 = vunpack.c.l.b16 %v2690
    %v2791 = vunpack.c.l.b16 %v2691
    %v2792 = vunpack.c.l.b16 %v2692
    %v2793 = vunpack.c.l.b16 %v2693
    %v2794 = vunpack.c.l.b16 %v2694
    %v2795 = vunpack.c.l.b16 %v2695
    %v2796 = vunpack.c.l.b16 %v2696
    %v2797 = vunpack.c.l.b16 %v2697
    %v2798 = vunpack.c.l.b16 %v2698
    %v2799 = vunpack.c.l.b16 %v2699
    %v2800 = vunpack.c.l.b16 %v2700
    %v2801 = vunpack.c.l.b16 %v2701
    %v2802 = vunpack.c.l.b16 %v2702
    %v2803 = vunpack.c.l.b16 %v2703
    %v2804 = vunpack.c.l.b16 %v2704
    %v2805 = vunpack.c.l.b16 %v2705
    %v2806 = vunpack.c.l.b16 %v2706
    %v2807 = vunpack.c.l.b16 %v2707
    %v2808 = vunpack.c.l.b16 %v2708
    %v2809 = vunpack.c.l.b16 %v2709
    %v2810 = vunpack.c.l.b16 %v2710
    %v2811 = vunpack.c.l.b16 %v2711
    %v2812 = vunpack.c.l.b16 %v2712
    %v2813 = vunpack.c.l.b16 %v2713
    %v2814 = vunpack.c.l.b16 %v2714
    %v2815 = vunpack.c.l.b16 %v2715
    %v2816 = vunpack.c.l.b16 %v2716
    %v2817 = vunpack.c.l.b16 %v2717
    %v2818 = vpack.c.b16 %v2771, %v2770
    %v2819 = vpack.c.b16 %v2773, %v2772
    %v2820 = vpack.c.b16 %v2775, %v2774
    %v2821 = vpack.c.b16 %v2777, %v2776
    %v2822 = vpack.c.b16 %v2779, %v2778
    %v2823 = vpack.c.b16 %v2781, %v2780
    %v2824 = vpack.c.b16 %v2783, %v2782
    %v2825 = vpack.c.b16 %v2785, %v2784
    %v2826 = vpack.c.b16 %v2787, %v2786
    %v2827 = vpack.c.b16 %v2789, %v2788
    %v2828 = vpack.c.b16 %v2791, %v2790
    %v2829 = vpack.c.b16 %v2793, %v2792
    %v2830 = vpack.c.b16 %v2795, %v2794
    %v2831 = vpack.c.b16 %v2797, %v2796
    %v2832 = vpack.c.b16 %v2799, %v2798
    %v2833 = vpack.c.b16 %v2801, %v2800
    %v2834 = vpack.c.b16 %v2803, %v2802
    %v2835 = vpack.c.b16 %v2805, %v2804
    %v2836 = vpack.c.b16 %v2807, %v2806
    %v2837 = vpack.c.b16 %v2809, %v2808
    %v2838 = vpack.c.b16 %v2811, %v2810
    %v2839 = vpack.c.b16 %v2813, %v2812
    %v2840 = vpack.c.b16 %v2815, %v2814
    %v2841 = vpack.c.b16 %v2817, %v2816
    %2866 = vmatpush.bf16.msra.mxu0 %v2825
    %2867 = vmatpush.bf16.msra.mxu0 %v2824
    %2868 = vmatpush.bf16.msra.mxu0 %v2823
    %2869 = vmatpush.bf16.msra.mxu0 %v2822
    %2870 = vmatpush.bf16.msra.mxu0 %v2821
    %2871 = vmatpush.bf16.msra.mxu0 %v2820
    %2872 = vmatpush.bf16.msra.mxu0 %v2819
    %2873 = vmatpush.bf16.msra.mxu0 %v2818
    %2874 = vmatmul.bf16.gmra.mxu0 %v2667
    %v2875 = vpop.f32.mrf.mxu0
    %v2876 = vadd.f32 %v2720, %v2875
    %v2877 = vpop.f32.mrf.mxu0
    %2878 = vdwg.mxu0
    %2879 = vmatpush.bf16.msra.mxu0 %v2833
    %2880 = vmatpush.bf16.msra.mxu0 %v2832
    %2881 = vmatpush.bf16.msra.mxu0 %v2831
    %2882 = vmatpush.bf16.msra.mxu0 %v2830
    %2883 = vmatpush.bf16.msra.mxu0 %v2829
    %2884 = vmatpush.bf16.msra.mxu0 %v2828
    %2885 = vmatpush.bf16.msra.mxu0 %v2827
    %2886 = vmatpush.bf16.msra.mxu0 %v2826
    %2887 = vmatmul.bf16.gmra.mxu0 %v2668
    %v2888 = vpop.f32.mrf.mxu0
    %v2889 = vadd.f32 %v2876, %v2888
    %v2890 = vpop.f32.mrf.mxu0
    %2891 = vdwg.mxu0
    %2892 = vmatpush.bf16.msra.mxu0 %v2841
    %2893 = vmatpush.bf16.msra.mxu0 %v2840
    %2894 = vmatpush.bf16.msra.mxu0 %v2839
    %2895 = vmatpush.bf16.msra.mxu0 %v2838
    %2896 = vmatpush.bf16.msra.mxu0 %v2837
    %2897 = vmatpush.bf16.msra.mxu0 %v2836
    %2898 = vmatpush.bf16.msra.mxu0 %v2835
    %2899 = vmatpush.bf16.msra.mxu0 %v2834
    %2900 = vmatmul.bf16.gmra.mxu0 %v2669
    %v2901 = vpop.f32.mrf.mxu0
    %v2902 = vadd.f32 %v2889, %v2901
    %v2903 = vpop.f32.mrf.mxu0
    %2904 = vdwg.mxu0
    %v2905 = vmax.f32 %v2902, 0.0
    %v2906 = vpack.c.bf16 %v2905, %v2905
    %v2907 = vld [vmem:[%s11] sm:$0xf]
    %v2908 = vld [vmem:[%s11 + $0x4] sm:$0xf]
    %v2909 = vld [vmem:[%s11 + $0x8] sm:$0xf]
    %v2910 = vld [vmem:[%s11 + $0xc] sm:$0xf]
    %v2911 = vld [vmem:[%s11 + $0x10] sm:$0xf]
    %v2912 = vld [vmem:[%s11 + $0x14] sm:$0xf]
    %v2913 = vld [vmem:[%s11 + $0x18] sm:$0xf]
    %v2914 = vld [vmem:[%s11 + $0x1c] sm:$0xf]
    %v2915 = vld [vmem:[%s11 + $0x20] sm:$0xf]
    %v2916 = vld [vmem:[%s11 + $0x24] sm:$0xf]
    %v2917 = vld [vmem:[%s11 + $0x28] sm:$0xf]
    %v2918 = vld [vmem:[%s11 + $0x2c] sm:$0xf]
    %v2919 = vld [vmem:[%s11 + $0x30] sm:$0xf]
    %v2920 = vld [vmem:[%s11 + $0x34] sm:$0xf]
    %v2921 = vld [vmem:[%s11 + $0x38] sm:$0xf]
    %v2922 = vld [vmem:[%s11 + $0x3c] sm:$0xf]
    %v2923 = vld [vmem:[%s12] sm:$0x1]
    %v2925 = vperm.slane %v2923, 0
    %v2943 = vunpack.c.l.b16 %v2907
    %v2944 = vunpack.c.l.b16 %v2908
    %v2945 = vunpack.c.l.b16 %v2909
    %v2946 = vunpack.c.l.b16 %v2910
    %v2947 = vunpack.c.l.b16 %v2911
    %v2948 = vunpack.c.l.b16 %v2912
    %v2949 = vunpack.c.l.b16 %v2913
    %v2950 = vunpack.c.l.b16 %v2914
    %v2951 = vunpack.c.l.b16 %v2915
    %v2952 = vunpack.c.l.b16 %v2916
    %v2953 = vunpack.c.l.b16 %v2917
    %v2954 = vunpack.c.l.b16 %v2918
    %v2955 = vunpack.c.l.b16 %v2919
    %v2956 = vunpack.c.l.b16 %v2920
    %v2957 = vunpack.c.l.b16 %v2921
    %v2958 = vunpack.c.l.b16 %v2922
    %v2959 = vpack.c.b16 %v2944, %v2943
    %v2960 = vpack.c.b16 %v2946, %v2945
    %v2961 = vpack.c.b16 %v2948, %v2947
    %v2962 = vpack.c.b16 %v2950, %v2949
    %v2963 = vpack.c.b16 %v2952, %v2951
    %v2964 = vpack.c.b16 %v2954, %v2953
    %v2965 = vpack.c.b16 %v2956, %v2955
    %v2966 = vpack.c.b16 %v2958, %v2957
    %2975 = vmatpush.bf16.msra.mxu0 %v2966
    %2976 = vmatpush.bf16.msra.mxu0 %v2965
    %2977 = vmatpush.bf16.msra.mxu0 %v2964
    %2978 = vmatpush.bf16.msra.mxu0 %v2963
    %2979 = vmatpush.bf16.msra.mxu0 %v2962
    %2980 = vmatpush.bf16.msra.mxu0 %v2961
    %2981 = vmatpush.bf16.msra.mxu0 %v2960
    %2982 = vmatpush.bf16.msra.mxu0 %v2959
    %2983 = vmatmul.bf16.gmra.mxu0 %v2906
    %v2984 = vpop.f32.mrf.mxu0
    %v2985 = vadd.f32 %v2925, %v2984
    %v2986 = vpop.f32.mrf.mxu0
    %2987 = vdwg.mxu0
    %vm2988 = vcmask 64512
    %v2989 = vsel %vm2988, %v2985, -inf
    %2990 = vmax.xlane.f32.xlu0 %v2989
    %v2991 = vpop.xlane.xlu0 %2990
    %v2992 = vsub.f32 %v2985, %v2991
    %v2993 = vmul.f32 %v2992, 1.442695
    %v2994 = vpow.pop %v2993
    %v2995 = vsel %vm2988, %v2994, 0.0
    %2996 = vadd.xlane.f32.xlu0 %v2995
    %v2997 = vpop.xlane.xlu0 %2996
    %v2998 = vlog2.pop %v2997
    %v2999 = vmul.f32 %v2998, 0.6931472
    %v3000 = vsub.f32 %v2992, %v2999
    %3001 = vst.msk [vmem:[#allocation2] sm:$0xff] %vm2988, %v3000
    // Predicated region
    $region54: #{graphsage_jk_forward.1} parent=1 // pred_check
      _
    $region55: #{graphsage_jk_forward.1} parent=1 // pred_check_branch
      %3003 = sbr.rel (0) target = $region57
    $region56: #{graphsage_jk_forward.1} parent=1 // pred_region
      %3005 = vsyncadd [#allocation3], 0
      %s3007 = sshll.u32 [#allocation2], 4
      %s3008 = int_to_ptr.vmem [resolvable:$true] %s3007
      %s3009 = sshll.u32 %s13, 4
      %s3010 = int_to_ptr.hbm [resolvable:$true] %s3009
      %3012 = dma.vmem_to_hbm [thread:$0]  %s3008, 128, %s3010, [#allocation3]
    $region57: #{graphsage_jk_forward.1} parent=1 // pred_fallthru
      _
    // Predicated region
    $region58: #{graphsage_jk_forward.1} parent=1 // pred_check
      _
    $region59: #{graphsage_jk_forward.1} parent=1 // pred_check_branch
      %3014 = sbr.rel (0) target = $region61
    $region60: #{graphsage_jk_forward.1} parent=1 // pred_region
      %3016 = dma.done [#allocation3], 128
    $region61: #{graphsage_jk_forward.1} parent=1 // pred_fallthru
      _
    %3017 = vsyncpa [#allocation3], 1

</llo_original>
